<compile_context>
chip_gen: v6e
topology: v6e:2x2x1
jax: 0.10.0
libtpu: 0.0.40
codegen_flags: <defaults>
</compile_context>

<pallas_src>
import math
from functools import partial

import jax
import jax.numpy as jnp
from jax.experimental import pallas as pl
from jax.experimental.pallas import tpu as pltpu


def _round_up(n, m):
    return ((n + m - 1) // m) * m


# ----------------------------------------------------------------------------- kernel
def ehr_kernel(x_ref, emb_ref, cw_ref, cb_ref,
               w1_ref, b1_ref, w2_ref, b2_ref,
               w3_ref, b3_ref, w4_ref, b4_ref,
               out_ref, enc_ref, *, S, W):
    TB = out_ref.shape[0]
    L = x_ref.shape[0] // TB            # padded tokens per row (multiple of 8)
    Vp, E = emb_ref.shape
    KE, C = cw_ref.shape
    K = KE // E
    P = (K - 1) // 2

    def mm(a, w_ref):
        # MXU matmul with f32 accumulation; activations cast to the weight dtype
        return jnp.dot(a.astype(w_ref.dtype), w_ref[...],
                       preferred_element_type=jnp.float32)

    # ---- embedding lookup: one-hot x (Vp, E) matmul over all TB*L tokens ----
    # TODO(synk): at realistic EHR vocab sizes replace the one-hot matmul with a
    # row gather (scalar-prefetch / DMA gather); O(L*Vp) work does not scale with V.
    tokens = x_ref[...]                                            # (TB*L, 1) int32
    lane = jax.lax.broadcasted_iota(jnp.int32, (TB * L, Vp), 1)
    onehot = (lane == tokens).astype(emb_ref.dtype)
    embeds = jnp.dot(onehot, emb_ref[...],
                     preferred_element_type=jnp.float32)           # (TB*L, E)
    embeds = embeds.reshape(TB, L, E)                              # aligned split (L % 8 == 0)

    # ---- Conv1d(kernel=K, padding=P) with padding folded into tokens: ONE matmul ----
    win = jnp.concatenate([embeds[:, k:k + W, :] for k in range(K)], axis=-1)  # (TB, W, K*E)
    conv = mm(win.reshape(TB * W, KE), cw_ref) + cb_ref[...]       # (TB*W, C)
    relu = jnp.maximum(conv, 0.0).reshape(TB, W, C)                # aligned split (W % 8 == 0)

    # positions outside [P, P+S) are conv/pool padding; zero stands in for the -inf
    # max_pool padding because ReLU >= 0 and every stride-1 window holds a real value
    j = jax.lax.broadcasted_iota(jnp.int32, (TB, W, C), 1)
    relu = jnp.where((j >= P) & (j < P + S), relu, 0.0)

    # ---- max_pool1d(kernel=K, stride=1, padding=P) ----
    pooled = relu[:, 0:S, :]
    for k in range(1, K):
        pooled = jnp.maximum(pooled, relu[:, k:k + S, :])          # (TB, S, C)

    # flatten in (s, c) order; w1 rows were pre-permuted in the glue to match
    # PyTorch's (c, s) flatten of the (B, C, S) tensor.
    flat = pooled.reshape(TB, S * C)

    h1 = jnp.maximum(mm(flat, w1_ref) + b1_ref[...], 0.0)          # (TB, 256)
    # TODO(synk): F.dropout(p=0.5, training=True) is stochastic; treated as identity (eval).
    h2 = mm(h1, w2_ref) + b2_ref[...]                              # (TB, 128)
    enc_ref[...] = h2                                              # padded lanes are exactly 0

    h3 = mm(h2, w3_ref) + b3_ref[...]                              # (TB, 256)
    # softplus with PyTorch semantics (beta=1, threshold=20); padded lanes feed
    # zero rows of w4 so their softplus(0)=log2 value never reaches the output.
    h3 = jnp.where(h3 > 20.0, h3, jnp.log1p(jnp.exp(jnp.minimum(h3, 20.0))))
    out_ref[...] = mm(h3, w4_ref) + b4_ref[...]                    # (TB, V*S)


# ----------------------------------------------------------------------------- wrapper
def ehr_encoding_forward(x, params, *, kernel_size, block_b=128, dot_dtype=jnp.float32):
    """x: (B, S) int32 token ids. Returns (out (B, V, S), encoded (B, 100))."""
    emb, cw, cb, w1, b1, w2, b2, w3, b3, w4, b4 = params
    B, S = x.shape
    V, E = emb.shape
    C = cw.shape[0]                     # ch_l1
    K = kernel_size
    assert K % 2 == 1, "conv 'same' folding and w1 permutation assume odd kernel"
    P = (K - 1) // 2
    features = math.floor(S + 2 * P - K + 1) + 2 * P - K + 1
    assert features == S, "w1 permutation assumes pooled feature length == S"

    S2 = S + 2 * P                      # conv positions incl. pool padding
    W = _round_up(S2, 8)                # sublane-aligned conv/pool length per row
    L = _round_up(W + 2 * P, 8)         # sublane-aligned padded tokens per row
    VS = V * S
    H1 = w1.shape[0]                    # 200
    enc_dim = w2.shape[0]               # 100
    H3 = w3.shape[0]                    # 200
    H1p, ENCp, H3p = _round_up(H1, 128), _round_up(enc_dim, 128), _round_up(H3, 128)

    # ---- batch tiling: TB rows per grid step (MXU M dimension, step amortization) ----
    # pick block_b as a multiple of 128 on v5e / 256 on v6e-v7x for full MXU rows.
    TB = min(block_b, B)
    if B > TB:                          # multi-step grid -> sublane-aligned batch tile
        TB = max(8, (TB // 8) * 8)
    grid_b = int(pl.cdiv(B, TB))
    Bp = grid_b * TB

    # ---- tokens: conv zero-padding + alignment padding folded into a sentinel id ----
    # pad id V indexes an all-zero row appended to the embedding table, so this does
    # not rely on emb[0] being zero (nn.Embedding padding_idx=0).
    Vp = _round_up(V + 1, 8)
    pad_id = V
    x_tok = jnp.pad(x.astype(jnp.int32), ((0, Bp - B), (2 * P, L - S - 2 * P)),
                    constant_values=pad_id)                        # (Bp, L)
    x_flat = x_tok.reshape(Bp * L, 1)

    # ---- weight glue: layout plumbing only (transpose / permute / zero-pad / cast) ----
    f32 = jnp.float32
    emb_k = jnp.zeros((Vp, E), dot_dtype).at[:V].set(emb.astype(dot_dtype))
    cw_k = jnp.transpose(cw, (2, 1, 0)).reshape(K * E, C).astype(dot_dtype)
    cb_k = cb.reshape(1, C).astype(f32)
    w1_k = jnp.transpose(w1).reshape(C, S, H1).transpose(1, 0, 2).reshape(S * C, H1)
    w1_k = jnp.pad(w1_k, ((0, 0), (0, H1p - H1))).astype(dot_dtype)
    b1_k = jnp.pad(b1, (0, H1p - H1)).reshape(1, H1p).astype(f32)
    w2_k = jnp.pad(jnp.transpose(w2), ((0, H1p - H1), (0, ENCp - enc_dim))).astype(dot_dtype)
    b2_k = jnp.pad(b2, (0, ENCp - enc_dim)).reshape(1, ENCp).astype(f32)
    w3_k = jnp.pad(jnp.transpose(w3), ((0, ENCp - enc_dim), (0, H3p - H3))).astype(dot_dtype)
    b3_k = jnp.pad(b3, (0, H3p - H3)).reshape(1, H3p).astype(f32)
    w4_k = jnp.pad(jnp.transpose(w4), ((0, H3p - H3), (0, 0))).astype(dot_dtype)
    b4_k = b4.reshape(1, VS).astype(f32)

    args = (x_flat, emb_k, cw_k, cb_k, w1_k, b1_k, w2_k, b2_k, w3_k, b3_k, w4_k, b4_k)

    def resident(a):                    # full-array block, constant across the grid
        zeros = (0,) * a.ndim
        # TODO(synk): single-buffer (pl.Buffered(1)) these constant-index blocks once
        # verified on the target toolchain; default double-buffering doubles their VMEM.
        return pl.BlockSpec(a.shape, lambda b, z=zeros: z)

    in_specs = [pl.BlockSpec((TB * L, 1), lambda b: (b, 0))] + [resident(a) for a in args[1:]]
    out_specs = (pl.BlockSpec((TB, VS), lambda b: (b, 0)),
                 pl.BlockSpec((TB, ENCp), lambda b: (b, 0)))
    out_shape = (jax.ShapeDtypeStruct((Bp, VS), f32),
                 jax.ShapeDtypeStruct((Bp, ENCp), f32))

    # VMEM budget: resident weights + token/output blocks are double-buffered by
    # Pallas; add slack for in-kernel intermediates.  Re-derive the cap (<= ~56 MiB)
    # when targeting v7x (64 MiB physical VMEM); at realistic vocab also tile w4
    # over the V*S lanes with a second 'parallel' grid axis instead of residency.
    weight_bytes = sum(int(a.size) * a.dtype.itemsize for a in args[1:])
    block_bytes = TB * (L * 4 + (VS + ENCp) * 4)
    interm_bytes = TB * (L * Vp + L * E + W * (K * E + C) + H1p + H3p) * 4
    vmem_limit = int(min(96 << 20,
                         max(32 << 20,
                             2 * (weight_bytes + block_bytes) + interm_bytes + (4 << 20))))

    flops = 2 * Bp * (L * Vp * E + W * K * E * C
                      + S * C * H1p + H1p * ENCp + ENCp * H3p + H3p * VS)
    transcendentals = 2 * Bp * H3p      # softplus = exp + log1p per element
    bytes_accessed = weight_bytes + Bp * L * 4 + Bp * (VS + ENCp) * 4

    out2, enc2 = pl.pallas_call(
        partial(ehr_kernel, S=S, W=W),
        out_shape=out_shape,
        grid=(grid_b,),
        in_specs=in_specs,
        out_specs=out_specs,
        compiler_params=pltpu.CompilerParams(
            dimension_semantics=("parallel",),      # batch tiles shard across v7x's 2 TCs
            vmem_limit_bytes=vmem_limit),
        cost_estimate=pl.CostEstimate(flops=int(flops),
                                      transcendentals=int(transcendentals),
                                      bytes_accessed=int(bytes_accessed)),
    )(*args)

    out = out2[:B].reshape(B, V, S)     # cheap wrapper-side reshape of a lane-dense slab
    enc = enc2[:B, :enc_dim]
    return out, enc


# ----------------------------------------------------------------------------- pure-JAX reference (PyTorch semantics)
def ref_forward(x, params, *, kernel_size):
    emb, cw, cb, w1, b1, w2, b2, w3, b3, w4, b4 = params
    B, S = x.shape
    V, E = emb.shape
    C, _, K = cw.shape
    P = (K - 1) // 2

    e = emb[x]                                   # (B, S, E)
    e = jnp.transpose(e, (0, 2, 1))              # (B, E, S)
    ep = jnp.pad(e, ((0, 0), (0, 0), (P, P)))
    windows = jnp.stack([ep[:, :, k:k + S] for k in range(K)], axis=-1)   # (B,E,S,K)
    conv = jnp.einsum('cek,besk->bcs', cw, windows) + cb[None, :, None]
    r = jnp.maximum(conv, 0.0)
    rp = jnp.pad(r, ((0, 0), (0, 0), (P, P)), constant_values=-jnp.inf)
    pooled = rp[:, :, 0:S]
    for k in range(1, K):
        pooled = jnp.maximum(pooled, rp[:, :, k:k + S])
    flat = pooled.reshape(B, C * S)
    h1 = jnp.maximum(flat @ w1.T + b1, 0.0)      # dropout treated as identity
    h2 = h1 @ w2.T + b2
    h3 = jax.nn.softplus(h2 @ w3.T + b3)
    h4 = h3 @ w4.T + b4
    return h4.reshape(B, V, S), h2


# ----------------------------------------------------------------------------- main
if __name__ == "__main__":
    vocab_size, max_seq_len, emb_size, kernel_size = 32, 8, 16, 3
    ch_l1 = emb_size // 2
    padding = (kernel_size - 1) // 2
    features = math.floor(max_seq_len + 2 * padding - kernel_size + 1) + 2 * padding - kernel_size + 1
    batch = 16

    key = jax.random.PRNGKey(0)
    ks = jax.random.split(key, 12)

    def init(k, shape, fan_in):
        return jax.random.normal(k, shape, jnp.float32) / jnp.sqrt(jnp.float32(fan_in))

    emb = init(ks[0], (vocab_size, emb_size), emb_size)
    emb = emb.at[0].set(0.0)                                      # nn.Embedding(padding_idx=0)
    cw = init(ks[1], (ch_l1, emb_size, kernel_size), emb_size * kernel_size)
    cb = init(ks[2], (ch_l1,), emb_size * kernel_size)
    w1 = init(ks[3], (200, ch_l1 * features), ch_l1 * features)
    b1 = init(ks[4], (200,), ch_l1 * features)
    w2 = init(ks[5], (100, 200), 200)
    b2 = init(ks[6], (100,), 200)
    w3 = init(ks[7], (200, 100), 100)
    b3 = init(ks[8], (200,), 100)
    w4 = init(ks[9], (vocab_size * max_seq_len, 200), 200)
    b4 = init(ks[10], (vocab_size * max_seq_len,), 200)
    params = (emb, cw, cb, w1, b1, w2, b2, w3, b3, w4, b4)

    x = jax.random.randint(ks[11], (batch, max_seq_len), 0, vocab_size, dtype=jnp.int32)

    out_gold, enc_gold = ref_forward(x, params, kernel_size=kernel_size)

    # f32 run on a multi-step batch-tiled grid (TB=8 -> 2 'parallel' grid steps)
    out, enc = ehr_encoding_forward(x, params, kernel_size=kernel_size, block_b=8)
    jax.block_until_ready((out, enc))
    assert out.shape == (batch, vocab_size, max_seq_len)
    assert enc.shape == (batch, 100)
    assert jnp.allclose(out, out_gold, rtol=1e-4, atol=1e-4)
    assert jnp.allclose(enc, enc_gold, rtol=1e-4, atol=1e-4)

    # bf16 weights / MXU inputs with f32 accumulation (single-step grid, TB=16)
    out_bf, enc_bf = ehr_encoding_forward(x, params, kernel_size=kernel_size,
                                          dot_dtype=jnp.bfloat16)
    jax.block_until_ready((out_bf, enc_bf))
    assert jnp.allclose(out_bf, out_gold, rtol=1e-1, atol=1e-1)
    assert jnp.allclose(enc_bf, enc_gold, rtol=1e-1, atol=1e-1)

    print("KERNEL_OK")
</pallas_src>

<mosaic_0001>
module attributes {stable_mosaic.version = 11 : i64} {
  func.func @ehr_kernel(%arg0: i32, %arg1: memref<192x1xi32, #tpu.memory_space<vmem>>, %arg2: memref<40x16xf32, #tpu.memory_space<vmem>>, %arg3: memref<48x8xf32, #tpu.memory_space<vmem>>, %arg4: memref<1x8xf32, #tpu.memory_space<vmem>>, %arg5: memref<64x256xf32, #tpu.memory_space<vmem>>, %arg6: memref<1x256xf32, #tpu.memory_space<vmem>>, %arg7: memref<256x128xf32, #tpu.memory_space<vmem>>, %arg8: memref<1x128xf32, #tpu.memory_space<vmem>>, %arg9: memref<128x256xf32, #tpu.memory_space<vmem>>, %arg10: memref<1x256xf32, #tpu.memory_space<vmem>>, %arg11: memref<256x256xf32, #tpu.memory_space<vmem>>, %arg12: memref<1x256xf32, #tpu.memory_space<vmem>>, %arg13: memref<8x256xf32, #tpu.memory_space<vmem>>, %arg14: memref<8x128xf32, #tpu.memory_space<vmem>>) attributes {dimension_semantics = [#tpu.dimension_semantics<parallel>], iteration_bounds = array<i64: 2>, scalar_prefetch = 0 : i64, scratch_operands = 0 : i64, tpu.core_type = #tpu.core_type<tc>, window_params = [{transform_indices = @transform_0, window_bounds = array<i64: 192, 1>}, {pipeline_mode = #tpu.pipeline_mode<synchronous>, transform_indices = @transform_1, window_bounds = array<i64: 40, 16>}, {pipeline_mode = #tpu.pipeline_mode<synchronous>, transform_indices = @transform_2, window_bounds = array<i64: 48, 8>}, {pipeline_mode = #tpu.pipeline_mode<synchronous>, transform_indices = @transform_3, window_bounds = array<i64: 1, 8>}, {pipeline_mode = #tpu.pipeline_mode<synchronous>, transform_indices = @transform_4, window_bounds = array<i64: 64, 256>}, {pipeline_mode = #tpu.pipeline_mode<synchronous>, transform_indices = @transform_5, window_bounds = array<i64: 1, 256>}, {pipeline_mode = #tpu.pipeline_mode<synchronous>, transform_indices = @transform_6, window_bounds = array<i64: 256, 128>}, {pipeline_mode = #tpu.pipeline_mode<synchronous>, transform_indices = @transform_7, window_bounds = array<i64: 1, 128>}, {pipeline_mode = #tpu.pipeline_mode<synchronous>, transform_indices = @transform_8, window_bounds = array<i64: 128, 256>}, {pipeline_mode = #tpu.pipeline_mode<synchronous>, transform_indices = @transform_9, window_bounds = array<i64: 1, 256>}, {pipeline_mode = #tpu.pipeline_mode<synchronous>, transform_indices = @transform_10, window_bounds = array<i64: 256, 256>}, {pipeline_mode = #tpu.pipeline_mode<synchronous>, transform_indices = @transform_11, window_bounds = array<i64: 1, 256>}, {transform_indices = @transform_12, window_bounds = array<i64: 8, 256>}, {transform_indices = @transform_13, window_bounds = array<i64: 8, 128>}]} {
    %c0 = arith.constant 0 : index
    %c0_0 = arith.constant 0 : index
    %0 = vector.load %arg1[%c0, %c0_0] : memref<192x1xi32, #tpu.memory_space<vmem>>, vector<192x1xi32>
    %1 = tpu.iota {dimensions = array<i32: 1>} : vector<192x40xi32>
    %2 = vector.broadcast %0 : vector<192x1xi32> to vector<192x40xi32>
    %3 = arith.cmpi eq, %1, %2 : vector<192x40xi32>
    %4 = arith.extui %3 : vector<192x40xi1> to vector<192x40xi32>
    %5 = arith.sitofp %4 : vector<192x40xi32> to vector<192x40xf32>
    %c0_1 = arith.constant 0 : index
    %c0_2 = arith.constant 0 : index
    %6 = vector.load %arg2[%c0_1, %c0_2] : memref<40x16xf32, #tpu.memory_space<vmem>>, vector<40x16xf32>
    %cst = arith.constant dense<0.000000e+00> : vector<192x16xf32>
    %7 = tpu.matmul %5, %6, %cst {dimension_numbers = #tpu.dot_dimension_numbers<[1], [0], [0], [1], [0, 0, 1, 1], [], []>} : vector<192x40xf32>, vector<40x16xf32>, vector<192x16xf32> -> vector<192x16xf32>
    %8 = vector.shape_cast %7 : vector<192x16xf32> to vector<8x24x16xf32>
    %9 = vector.extract_strided_slice %8 {offsets = [0, 0, 0], sizes = [8, 16, 16], strides = [1, 1, 1]} : vector<8x24x16xf32> to vector<8x16x16xf32>
    %10 = vector.extract_strided_slice %8 {offsets = [0, 1, 0], sizes = [8, 16, 16], strides = [1, 1, 1]} : vector<8x24x16xf32> to vector<8x16x16xf32>
    %11 = vector.extract_strided_slice %8 {offsets = [0, 2, 0], sizes = [8, 16, 16], strides = [1, 1, 1]} : vector<8x24x16xf32> to vector<8x16x16xf32>
    %12 = tpu.concatenate %9, %10, %11 in 2 : vector<8x16x16xf32>, vector<8x16x16xf32>, vector<8x16x16xf32> -> vector<8x16x48xf32>
    %13 = vector.shape_cast %12 : vector<8x16x48xf32> to vector<128x48xf32>
    %c0_3 = arith.constant 0 : index
    %c0_4 = arith.constant 0 : index
    %14 = vector.load %arg3[%c0_3, %c0_4] : memref<48x8xf32, #tpu.memory_space<vmem>>, vector<48x8xf32>
    %cst_5 = arith.constant dense<0.000000e+00> : vector<128x8xf32>
    %15 = tpu.matmul %13, %14, %cst_5 {dimension_numbers = #tpu.dot_dimension_numbers<[1], [0], [0], [1], [0, 0, 1, 1], [], []>} : vector<128x48xf32>, vector<48x8xf32>, vector<128x8xf32> -> vector<128x8xf32>
    %c0_6 = arith.constant 0 : index
    %c0_7 = arith.constant 0 : index
    %16 = vector.load %arg4[%c0_6, %c0_7] : memref<1x8xf32, #tpu.memory_space<vmem>>, vector<1x8xf32>
    %17 = vector.broadcast %16 : vector<1x8xf32> to vector<128x8xf32>
    %18 = arith.addf %15, %17 : vector<128x8xf32>
    %cst_8 = arith.constant 0.000000e+00 : f32
    %19 = vector.broadcast %cst_8 : f32 to vector<128x8xf32>
    %20 = arith.maximumf %18, %19 : vector<128x8xf32>
    %21 = vector.shape_cast %20 : vector<128x8xf32> to vector<8x16x8xf32>
    %22 = tpu.iota {dimensions = array<i32: 1>} : vector<8x16x8xi32>
    %c1_i32 = arith.constant 1 : i32
    %23 = vector.broadcast %c1_i32 : i32 to vector<8x16x8xi32>
    %24 = arith.cmpi sge, %22, %23 : vector<8x16x8xi32>
    %c9_i32 = arith.constant 9 : i32
    %25 = vector.broadcast %c9_i32 : i32 to vector<8x16x8xi32>
    %26 = arith.cmpi slt, %22, %25 : vector<8x16x8xi32>
    %27 = arith.andi %24, %26 : vector<8x16x8xi1>
    %cst_9 = arith.constant 0.000000e+00 : f32
    %28 = vector.broadcast %cst_9 : f32 to vector<8x16x8xf32>
    %29 = arith.select %27, %21, %28 : vector<8x16x8xi1>, vector<8x16x8xf32>
    %30 = vector.extract_strided_slice %29 {offsets = [0, 0, 0], sizes = [8, 8, 8], strides = [1, 1, 1]} : vector<8x16x8xf32> to vector<8x8x8xf32>
    %31 = vector.extract_strided_slice %29 {offsets = [0, 1, 0], sizes = [8, 8, 8], strides = [1, 1, 1]} : vector<8x16x8xf32> to vector<8x8x8xf32>
    %32 = arith.maximumf %30, %31 : vector<8x8x8xf32>
    %33 = vector.extract_strided_slice %29 {offsets = [0, 2, 0], sizes = [8, 8, 8], strides = [1, 1, 1]} : vector<8x16x8xf32> to vector<8x8x8xf32>
    %34 = arith.maximumf %32, %33 : vector<8x8x8xf32>
    %35 = vector.shape_cast %34 : vector<8x8x8xf32> to vector<8x64xf32>
    %c0_10 = arith.constant 0 : index
    %c0_11 = arith.constant 0 : index
    %36 = vector.load %arg5[%c0_10, %c0_11] : memref<64x256xf32, #tpu.memory_space<vmem>>, vector<64x256xf32>
    %cst_12 = arith.constant dense<0.000000e+00> : vector<8x256xf32>
    %37 = tpu.matmul %35, %36, %cst_12 {dimension_numbers = #tpu.dot_dimension_numbers<[1], [0], [0], [1], [0, 0, 1, 1], [], []>} : vector<8x64xf32>, vector<64x256xf32>, vector<8x256xf32> -> vector<8x256xf32>
    %c0_13 = arith.constant 0 : index
    %c0_14 = arith.constant 0 : index
    %38 = vector.load %arg6[%c0_13, %c0_14] : memref<1x256xf32, #tpu.memory_space<vmem>>, vector<1x256xf32>
    %39 = vector.broadcast %38 : vector<1x256xf32> to vector<8x256xf32>
    %40 = arith.addf %37, %39 : vector<8x256xf32>
    %cst_15 = arith.constant 0.000000e+00 : f32
    %41 = vector.broadcast %cst_15 : f32 to vector<8x256xf32>
    %42 = arith.maximumf %40, %41 : vector<8x256xf32>
    %c0_16 = arith.constant 0 : index
    %c0_17 = arith.constant 0 : index
    %43 = vector.load %arg7[%c0_16, %c0_17] : memref<256x128xf32, #tpu.memory_space<vmem>>, vector<256x128xf32>
    %cst_18 = arith.constant dense<0.000000e+00> : vector<8x128xf32>
    %44 = tpu.matmul %42, %43, %cst_18 {dimension_numbers = #tpu.dot_dimension_numbers<[1], [0], [0], [1], [0, 0, 1, 1], [], []>} : vector<8x256xf32>, vector<256x128xf32>, vector<8x128xf32> -> vector<8x128xf32>
    %c0_19 = arith.constant 0 : index
    %c0_20 = arith.constant 0 : index
    %45 = vector.load %arg8[%c0_19, %c0_20] : memref<1x128xf32, #tpu.memory_space<vmem>>, vector<1x128xf32>
    %46 = vector.broadcast %45 : vector<1x128xf32> to vector<8x128xf32>
    %47 = arith.addf %44, %46 : vector<8x128xf32>
    %c0_21 = arith.constant 0 : index
    %c0_22 = arith.constant 0 : index
    %48 = vector.load %arg14[%c0_21, %c0_22] : memref<8x128xf32, #tpu.memory_space<vmem>>, vector<8x128xf32>
    tpu.vector_store %arg14[%c0_21, %c0_22], %47 {strides = array<i32>} : memref<8x128xf32, #tpu.memory_space<vmem>>, vector<8x128xf32>,
    %c0_23 = arith.constant 0 : index
    %c0_24 = arith.constant 0 : index
    %49 = vector.load %arg9[%c0_23, %c0_24] : memref<128x256xf32, #tpu.memory_space<vmem>>, vector<128x256xf32>
    %cst_25 = arith.constant dense<0.000000e+00> : vector<8x256xf32>
    %50 = tpu.matmul %47, %49, %cst_25 {dimension_numbers = #tpu.dot_dimension_numbers<[1], [0], [0], [1], [0, 0, 1, 1], [], []>} : vector<8x128xf32>, vector<128x256xf32>, vector<8x256xf32> -> vector<8x256xf32>
    %c0_26 = arith.constant 0 : index
    %c0_27 = arith.constant 0 : index
    %51 = vector.load %arg10[%c0_26, %c0_27] : memref<1x256xf32, #tpu.memory_space<vmem>>, vector<1x256xf32>
    %52 = vector.broadcast %51 : vector<1x256xf32> to vector<8x256xf32>
    %53 = arith.addf %50, %52 : vector<8x256xf32>
    %cst_28 = arith.constant 2.000000e+01 : f32
    %54 = vector.broadcast %cst_28 : f32 to vector<8x256xf32>
    %55 = arith.cmpf ogt, %53, %54 : vector<8x256xf32>
    %cst_29 = arith.constant 2.000000e+01 : f32
    %56 = vector.broadcast %cst_29 : f32 to vector<8x256xf32>
    %57 = arith.minimumf %53, %56 : vector<8x256xf32>
    %58 = math.exp %57 : vector<8x256xf32>
    %59 = math.log1p %58 : vector<8x256xf32>
    %60 = arith.select %55, %53, %59 : vector<8x256xi1>, vector<8x256xf32>
    %c0_30 = arith.constant 0 : index
    %c0_31 = arith.constant 0 : index
    %61 = vector.load %arg11[%c0_30, %c0_31] : memref<256x256xf32, #tpu.memory_space<vmem>>, vector<256x256xf32>
    %cst_32 = arith.constant dense<0.000000e+00> : vector<8x256xf32>
    %62 = tpu.matmul %60, %61, %cst_32 {dimension_numbers = #tpu.dot_dimension_numbers<[1], [0], [0], [1], [0, 0, 1, 1], [], []>} : vector<8x256xf32>, vector<256x256xf32>, vector<8x256xf32> -> vector<8x256xf32>
    %c0_33 = arith.constant 0 : index
    %c0_34 = arith.constant 0 : index
    %63 = vector.load %arg12[%c0_33, %c0_34] : memref<1x256xf32, #tpu.memory_space<vmem>>, vector<1x256xf32>
    %64 = vector.broadcast %63 : vector<1x256xf32> to vector<8x256xf32>
    %65 = arith.addf %62, %64 : vector<8x256xf32>
    %c0_35 = arith.constant 0 : index
    %c0_36 = arith.constant 0 : index
    %66 = vector.load %arg13[%c0_35, %c0_36] : memref<8x256xf32, #tpu.memory_space<vmem>>, vector<8x256xf32>
    tpu.vector_store %arg13[%c0_35, %c0_36], %65 {strides = array<i32>} : memref<8x256xf32, #tpu.memory_space<vmem>>, vector<8x256xf32>,
    return
  }
  func.func @transform_0(%arg0: i32) -> (i32, i32) {
    %c0_i32 = arith.constant 0 : i32
    %c0_i32_0 = arith.constant 0 : i32
    return %arg0, %c0_i32 : i32, i32
  }
  func.func @transform_1(%arg0: i32) -> (i32, i32) {
    %c0_i32 = arith.constant 0 : i32
    %c0_i32_0 = arith.constant 0 : i32
    %c0_i32_1 = arith.constant 0 : i32
    return %c0_i32, %c0_i32_0 : i32, i32
  }
  func.func @transform_2(%arg0: i32) -> (i32, i32) {
    %c0_i32 = arith.constant 0 : i32
    %c0_i32_0 = arith.constant 0 : i32
    %c0_i32_1 = arith.constant 0 : i32
    return %c0_i32, %c0_i32_0 : i32, i32
  }
  func.func @transform_3(%arg0: i32) -> (i32, i32) {
    %c0_i32 = arith.constant 0 : i32
    %c0_i32_0 = arith.constant 0 : i32
    %c0_i32_1 = arith.constant 0 : i32
    return %c0_i32, %c0_i32_0 : i32, i32
  }
  func.func @transform_4(%arg0: i32) -> (i32, i32) {
    %c0_i32 = arith.constant 0 : i32
    %c0_i32_0 = arith.constant 0 : i32
    %c0_i32_1 = arith.constant 0 : i32
    return %c0_i32, %c0_i32_0 : i32, i32
  }
  func.func @transform_5(%arg0: i32) -> (i32, i32) {
    %c0_i32 = arith.constant 0 : i32
    %c0_i32_0 = arith.constant 0 : i32
    %c0_i32_1 = arith.constant 0 : i32
    return %c0_i32, %c0_i32_0 : i32, i32
  }
  func.func @transform_6(%arg0: i32) -> (i32, i32) {
    %c0_i32 = arith.constant 0 : i32
    %c0_i32_0 = arith.constant 0 : i32
    %c0_i32_1 = arith.constant 0 : i32
    return %c0_i32, %c0_i32_0 : i32, i32
  }
  func.func @transform_7(%arg0: i32) -> (i32, i32) {
    %c0_i32 = arith.constant 0 : i32
    %c0_i32_0 = arith.constant 0 : i32
    %c0_i32_1 = arith.constant 0 : i32
    return %c0_i32, %c0_i32_0 : i32, i32
  }
  func.func @transform_8(%arg0: i32) -> (i32, i32) {
    %c0_i32 = arith.constant 0 : i32
    %c0_i32_0 = arith.constant 0 : i32
    %c0_i32_1 = arith.constant 0 : i32
    return %c0_i32, %c0_i32_0 : i32, i32
  }
  func.func @transform_9(%arg0: i32) -> (i32, i32) {
    %c0_i32 = arith.constant 0 : i32
    %c0_i32_0 = arith.constant 0 : i32
    %c0_i32_1 = arith.constant 0 : i32
    return %c0_i32, %c0_i32_0 : i32, i32
  }
  func.func @transform_10(%arg0: i32) -> (i32, i32) {
    %c0_i32 = arith.constant 0 : i32
    %c0_i32_0 = arith.constant 0 : i32
    %c0_i32_1 = arith.constant 0 : i32
    return %c0_i32, %c0_i32_0 : i32, i32
  }
  func.func @transform_11(%arg0: i32) -> (i32, i32) {
    %c0_i32 = arith.constant 0 : i32
    %c0_i32_0 = arith.constant 0 : i32
    %c0_i32_1 = arith.constant 0 : i32
    return %c0_i32, %c0_i32_0 : i32, i32
  }
  func.func @transform_12(%arg0: i32) -> (i32, i32) {
    %c0_i32 = arith.constant 0 : i32
    %c0_i32_0 = arith.constant 0 : i32
    return %arg0, %c0_i32 : i32, i32
  }
  func.func @transform_13(%arg0: i32) -> (i32, i32) {
    %c0_i32 = arith.constant 0 : i32
    %c0_i32_0 = arith.constant 0 : i32
    return %arg0, %c0_i32 : i32, i32
  }
}

</mosaic_0001>

<llo_original>
// kernel: tpu_custom_call.1
$region0: #{tpu_custom_call.1}
  #allocation0 [shape = 'u32[]', space=smem, size = 0x4, offset = 0x4, fixed_abs, tag = 'smem constant byte address 0x4 - core index']
  #allocation1 [shape = 'u32[144,128]{1,0:T(1,128)}', space=vmem, size = 0x12000, scoped, tag = 'internal scratch']
  %s0 = inlined_call_operand.vmem [shape: s32[384,1], index: 0, kind: input, shape index: {}]
  %s1 = inlined_call_operand.vmem [shape: f32[40,16], index: 1, kind: input, shape index: {}]
  %s2 = inlined_call_operand.vmem [shape: f32[48,8], index: 2, kind: input, shape index: {}]
  %s3 = inlined_call_operand.vmem [shape: f32[1,8], index: 3, kind: input, shape index: {}]
  %s4 = inlined_call_operand.hbm [shape: f32[64,256], index: 4, kind: input, shape index: {}]
  %s5 = inlined_call_operand.vmem [shape: f32[1,256], index: 5, kind: input, shape index: {}]
  %s6 = inlined_call_operand.hbm [shape: f32[256,128], index: 6, kind: input, shape index: {}]
  %s7 = inlined_call_operand.hbm [shape: f32[1,128], index: 7, kind: input, shape index: {}]
  %s8 = inlined_call_operand.hbm [shape: f32[128,256], index: 8, kind: input, shape index: {}]
  %s9 = inlined_call_operand.vmem [shape: f32[1,256], index: 9, kind: input, shape index: {}]
  %s10 = inlined_call_operand.vmem [shape: f32[256,256], index: 10, kind: input, shape index: {}]
  %s11 = inlined_call_operand.hbm [shape: f32[1,256], index: 11, kind: input, shape index: {}]
  %s12 = inlined_call_operand.hbm [shape: f32[16,256], index: 12, kind: output, shape index: {0}]
  %s13 = inlined_call_operand.hbm [shape: f32[16,128], index: 13, kind: output, shape index: {1}]
  %14 = xla_tuple %s12, %s13
  %s15 = sld [smem:[#allocation0]]
  $region109: #{tpu_custom_call.1} parent=0
    _
  %s17 = ssub.s32 1, %s15
  %s18 = scalar_select 0, %s17, %s15
  $region1: #{tpu_custom_call.1} parent=0
    #allocation2 [shape = 'u8[65536]{0}', space=vmem, size = 0x10000, scoped, tag = 'input window, operand 4, single buffered']
    #allocation3 [shape = 's32[2]{0}', space=sflag, size = 0x8, scoped, tag = 'scoped memory for tpu_custom_call.1']
    #allocation4 [shape = 's32[2]{0}', space=sflag, size = 0x8, scoped, tag = 'scoped memory for tpu_custom_call.1']
    #allocation5 [shape = 'u8[131072]{0}', space=vmem, size = 0x20000, scoped, tag = 'input window, operand 6, single buffered']
    #allocation6 [shape = 's32[1]{0}', space=sflag, size = 0x4, scoped, tag = 'scoped memory for tpu_custom_call.1']
    #allocation7 [shape = 'u8[512]{0}', space=vmem, size = 0x400, scoped, tag = 'input window, operand 7, single buffered']
    #allocation8 [shape = 'u8[131072]{0}', space=vmem, size = 0x20000, scoped, tag = 'input window, operand 8, single buffered']
    #allocation9 [shape = 's32[1]{0}', space=sflag, size = 0x4, scoped, tag = 'scoped memory for tpu_custom_call.1']
    #allocation10 [shape = 'u8[1024]{0}', space=vmem, size = 0x400, scoped, tag = 'input window, operand 11, single buffered']
    #allocation11 [shape = 'u8[16384]{0}', space=vmem, size = 0x4000, scoped, tag = 'output window, operand 0']
    #allocation12 [shape = 'u8[8192]{0}', space=vmem, size = 0x2000, scoped, tag = 'output window, operand 1']
    #allocation13 [shape = 's32[2]{0}', space=sflag, size = 0x8, scoped, tag = 'scoped memory for tpu_custom_call.1']
    %19 = vsyncpa [#allocation3], 0
    %20 = vsyncpa [#allocation6], 0
    %21 = vsyncpa [#allocation9], 0
    %22 = vsyncpa [#allocation4], 0
    %s23 = scalar_lea.sflag [#allocation4], 1
    %24 = vsyncpa %s23, 0
    %25 = vsyncpa [#allocation13], 0
    %s26 = scalar_lea.sflag [#allocation13], 1
    %27 = vsyncpa %s26, 0
    loop: start=0, step=1, limit=4
    $region2: #{tpu_custom_call.1} parent=1 // loop_pre_header
      _
    $region3: #{tpu_custom_call.1} parent=1 // loop_header
      %s29 = sphi 0, %s33
      %p30 = scmp.ge.s32.totalorder %s29, 4
      %s39 = sphi 0, %s41
      %s42 = sphi 0, %s39
      %s43 = sphi 0, %s42
      %s59 = sphi 0, %s43
      %s63 = sphi 0, %s63
      %s65 = sphi 0, %s63
      %s66 = sphi 0, %s65
      %s80 = sphi 0, %s66
      %s84 = sphi 0, %s84
      %s86 = sphi 0, %s84
      %s87 = sphi 0, %s86
      %s101 = sphi 0, %s87
      %s105 = sphi 0, %s105
      %s107 = sphi 0, %s105
      %s108 = sphi 0, %s107
      %s122 = sphi 0, %s108
      %s126 = sphi 0, %s126
      %s128 = sphi 0, %s126
      %s129 = sphi 0, %s128
      %s143 = sphi 0, %s129
      %s147 = sphi 0, %s147
      %s149 = sphi 0, %s147
      %s150 = sphi 0, %s149
      %s164 = sphi 0, %s150
      %s168 = sphi 0, %s168
      %s170 = sphi 0, %s168
      %s171 = sphi 0, %s170
      %s185 = sphi 0, %s171
      %s189 = sphi 0, %s189
      %s191 = sphi 0, %s189
      %s192 = sphi 0, %s191
      %s206 = sphi 0, %s192
      %s210 = sphi 0, %s210
      %s212 = sphi 0, %s210
      %s213 = sphi 0, %s212
      %s227 = sphi 0, %s213
      %s231 = sphi 0, %s231
      %s233 = sphi 0, %s231
      %s234 = sphi 0, %s233
      %s248 = sphi 0, %s234
      %s252 = sphi 0, %s252
      %s254 = sphi 0, %s252
      %s255 = sphi 0, %s254
      %s269 = sphi 0, %s255
      %s273 = sphi 0, %s273
      %s275 = sphi 0, %s273
      %s276 = sphi 0, %s275
      %s290 = sphi 0, %s276
      %s296 = sphi 0, %s298
      %s299 = sphi 0, %s296
      %s300 = sphi 0, %s299
      %s316 = sphi 0, %s300
      %s322 = sphi 0, %s324
      %s325 = sphi 0, %s322
      %s326 = sphi 0, %s325
      %s342 = sphi 0, %s326
    $region4: #{tpu_custom_call.1} parent=1 // loop_header_branch
      %32 = sbr.rel (%p30) target = $region8
    $region5: #{tpu_custom_call.1} parent=1 // loop_body
      %s34 = ssub.s32 %s29, 1
      %s35 = ssub.s32 %s29, 2
      %s36 = sadd.s32 %s29, 1
      %s37 = ssub.s32 %s29, %s36
      %p38 = scmp.eq.s32.totalorder %s37, 0
      %s40 = sadd.s32 %s39, 1
      %s41 = scalar_select %p38, %s39, %s40
      %p44 = pneg %p38
      %p45 = scmp.eq.s32.totalorder %s29, 1
      %p46 = por %p44, %p45
      %p47 = scmp.ne.s32.totalorder %s39, %s42
      %p48 = scmp.eq.s32.totalorder %s29, 0
      %p49 = por %p47, %p48
      %p50 = scmp.ne.s32.totalorder %s39, %s42
      %p51 = scmp.eq.s32.totalorder %s34, 1
      %p52 = por %p50, %p51
      %p53 = scmp.ne.s32.totalorder %s42, %s43
      %p54 = scmp.eq.s32.totalorder %s34, 0
      %p55 = por %p53, %p54
      %p56 = scmp.ne.s32.totalorder %s42, %s43
      %p57 = scmp.eq.s32.totalorder %s35, 1
      %p58 = por %p56, %p57
      %p60 = scmp.ne.s32.totalorder %s43, %s59
      %p61 = scmp.eq.s32.totalorder %s35, 0
      %p62 = por %p60, %p61
      %s64 = sadd.s32 %s63, 1
      %p67 = scmp.eq.s32.totalorder %s29, 1
      %p68 = scmp.ne.s32.totalorder %s63, %s65
      %p69 = scmp.eq.s32.totalorder %s29, 0
      %p70 = por %p68, %p69
      %p71 = scmp.ne.s32.totalorder %s63, %s65
      %p72 = scmp.eq.s32.totalorder %s34, 1
      %p73 = por %p71, %p72
      %p74 = scmp.ne.s32.totalorder %s65, %s66
      %p75 = scmp.eq.s32.totalorder %s34, 0
      %p76 = por %p74, %p75
      %p77 = scmp.ne.s32.totalorder %s65, %s66
      %p78 = scmp.eq.s32.totalorder %s35, 1
      %p79 = por %p77, %p78
      %p81 = scmp.ne.s32.totalorder %s66, %s80
      %p82 = scmp.eq.s32.totalorder %s35, 0
      %p83 = por %p81, %p82
      %s85 = sadd.s32 %s84, 1
      %p88 = scmp.eq.s32.totalorder %s29, 1
      %p89 = scmp.ne.s32.totalorder %s84, %s86
      %p90 = scmp.eq.s32.totalorder %s29, 0
      %p91 = por %p89, %p90
      %p92 = scmp.ne.s32.totalorder %s84, %s86
      %p93 = scmp.eq.s32.totalorder %s34, 1
      %p94 = por %p92, %p93
      %p95 = scmp.ne.s32.totalorder %s86, %s87
      %p96 = scmp.eq.s32.totalorder %s34, 0
      %p97 = por %p95, %p96
      %p98 = scmp.ne.s32.totalorder %s86, %s87
      %p99 = scmp.eq.s32.totalorder %s35, 1
      %p100 = por %p98, %p99
      %p102 = scmp.ne.s32.totalorder %s87, %s101
      %p103 = scmp.eq.s32.totalorder %s35, 0
      %p104 = por %p102, %p103
      %s106 = sadd.s32 %s105, 1
      %p109 = scmp.eq.s32.totalorder %s29, 1
      %p110 = scmp.ne.s32.totalorder %s105, %s107
      %p111 = scmp.eq.s32.totalorder %s29, 0
      %p112 = por %p110, %p111
      %p113 = scmp.ne.s32.totalorder %s105, %s107
      %p114 = scmp.eq.s32.totalorder %s34, 1
      %p115 = por %p113, %p114
      %p116 = scmp.ne.s32.totalorder %s107, %s108
      %p117 = scmp.eq.s32.totalorder %s34, 0
      %p118 = por %p116, %p117
      %p119 = scmp.ne.s32.totalorder %s107, %s108
      %p120 = scmp.eq.s32.totalorder %s35, 1
      %p121 = por %p119, %p120
      %p123 = scmp.ne.s32.totalorder %s108, %s122
      %p124 = scmp.eq.s32.totalorder %s35, 0
      %p125 = por %p123, %p124
      %s127 = sadd.s32 %s126, 1
      %p130 = scmp.eq.s32.totalorder %s29, 1
      %p131 = scmp.ne.s32.totalorder %s126, %s128
      %p132 = scmp.eq.s32.totalorder %s29, 0
      %p133 = por %p131, %p132
      %p134 = scmp.ne.s32.totalorder %s126, %s128
      %p135 = scmp.eq.s32.totalorder %s34, 1
      %p136 = por %p134, %p135
      %p137 = scmp.ne.s32.totalorder %s128, %s129
      %p138 = scmp.eq.s32.totalorder %s34, 0
      %p139 = por %p137, %p138
      %p140 = scmp.ne.s32.totalorder %s128, %s129
      %p141 = scmp.eq.s32.totalorder %s35, 1
      %p142 = por %p140, %p141
      %p144 = scmp.ne.s32.totalorder %s129, %s143
      %p145 = scmp.eq.s32.totalorder %s35, 0
      %p146 = por %p144, %p145
      %s148 = sadd.s32 %s147, 1
      %p151 = scmp.eq.s32.totalorder %s29, 1
      %p152 = scmp.ne.s32.totalorder %s147, %s149
      %p153 = scmp.eq.s32.totalorder %s29, 0
      %p154 = por %p152, %p153
      %p155 = scmp.ne.s32.totalorder %s147, %s149
      %p156 = scmp.eq.s32.totalorder %s34, 1
      %p157 = por %p155, %p156
      %p158 = scmp.ne.s32.totalorder %s149, %s150
      %p159 = scmp.eq.s32.totalorder %s34, 0
      %p160 = por %p158, %p159
      %p161 = scmp.ne.s32.totalorder %s149, %s150
      %p162 = scmp.eq.s32.totalorder %s35, 1
      %p163 = por %p161, %p162
      %p165 = scmp.ne.s32.totalorder %s150, %s164
      %p166 = scmp.eq.s32.totalorder %s35, 0
      %p167 = por %p165, %p166
      %s169 = sadd.s32 %s168, 1
      %p172 = scmp.eq.s32.totalorder %s29, 1
      %p173 = scmp.ne.s32.totalorder %s168, %s170
      %p174 = scmp.eq.s32.totalorder %s29, 0
      %p175 = por %p173, %p174
      %p176 = scmp.ne.s32.totalorder %s168, %s170
      %p177 = scmp.eq.s32.totalorder %s34, 1
      %p178 = por %p176, %p177
      %p179 = scmp.ne.s32.totalorder %s170, %s171
      %p180 = scmp.eq.s32.totalorder %s34, 0
      %p181 = por %p179, %p180
      %p182 = scmp.ne.s32.totalorder %s170, %s171
      %p183 = scmp.eq.s32.totalorder %s35, 1
      %p184 = por %p182, %p183
      %p186 = scmp.ne.s32.totalorder %s171, %s185
      %p187 = scmp.eq.s32.totalorder %s35, 0
      %p188 = por %p186, %p187
      %s190 = sadd.s32 %s189, 1
      %p193 = scmp.eq.s32.totalorder %s29, 1
      %p194 = scmp.ne.s32.totalorder %s189, %s191
      %p195 = scmp.eq.s32.totalorder %s29, 0
      %p196 = por %p194, %p195
      %p197 = scmp.ne.s32.totalorder %s189, %s191
      %p198 = scmp.eq.s32.totalorder %s34, 1
      %p199 = por %p197, %p198
      %p200 = scmp.ne.s32.totalorder %s191, %s192
      %p201 = scmp.eq.s32.totalorder %s34, 0
      %p202 = por %p200, %p201
      %p203 = scmp.ne.s32.totalorder %s191, %s192
      %p204 = scmp.eq.s32.totalorder %s35, 1
      %p205 = por %p203, %p204
      %p207 = scmp.ne.s32.totalorder %s192, %s206
      %p208 = scmp.eq.s32.totalorder %s35, 0
      %p209 = por %p207, %p208
      %s211 = sadd.s32 %s210, 1
      %p214 = scmp.eq.s32.totalorder %s29, 1
      %p215 = scmp.ne.s32.totalorder %s210, %s212
      %p216 = scmp.eq.s32.totalorder %s29, 0
      %p217 = por %p215, %p216
      %p218 = scmp.ne.s32.totalorder %s210, %s212
      %p219 = scmp.eq.s32.totalorder %s34, 1
      %p220 = por %p218, %p219
      %p221 = scmp.ne.s32.totalorder %s212, %s213
      %p222 = scmp.eq.s32.totalorder %s34, 0
      %p223 = por %p221, %p222
      %p224 = scmp.ne.s32.totalorder %s212, %s213
      %p225 = scmp.eq.s32.totalorder %s35, 1
      %p226 = por %p224, %p225
      %p228 = scmp.ne.s32.totalorder %s213, %s227
      %p229 = scmp.eq.s32.totalorder %s35, 0
      %p230 = por %p228, %p229
      %s232 = sadd.s32 %s231, 1
      %p235 = scmp.eq.s32.totalorder %s29, 1
      %p236 = scmp.ne.s32.totalorder %s231, %s233
      %p237 = scmp.eq.s32.totalorder %s29, 0
      %p238 = por %p236, %p237
      %p239 = scmp.ne.s32.totalorder %s231, %s233
      %p240 = scmp.eq.s32.totalorder %s34, 1
      %p241 = por %p239, %p240
      %p242 = scmp.ne.s32.totalorder %s233, %s234
      %p243 = scmp.eq.s32.totalorder %s34, 0
      %p244 = por %p242, %p243
      %p245 = scmp.ne.s32.totalorder %s233, %s234
      %p246 = scmp.eq.s32.totalorder %s35, 1
      %p247 = por %p245, %p246
      %p249 = scmp.ne.s32.totalorder %s234, %s248
      %p250 = scmp.eq.s32.totalorder %s35, 0
      %p251 = por %p249, %p250
      %s253 = sadd.s32 %s252, 1
      %p256 = scmp.eq.s32.totalorder %s29, 1
      %p257 = scmp.ne.s32.totalorder %s252, %s254
      %p258 = scmp.eq.s32.totalorder %s29, 0
      %p259 = por %p257, %p258
      %p260 = scmp.ne.s32.totalorder %s252, %s254
      %p261 = scmp.eq.s32.totalorder %s34, 1
      %p262 = por %p260, %p261
      %p263 = scmp.ne.s32.totalorder %s254, %s255
      %p264 = scmp.eq.s32.totalorder %s34, 0
      %p265 = por %p263, %p264
      %p266 = scmp.ne.s32.totalorder %s254, %s255
      %p267 = scmp.eq.s32.totalorder %s35, 1
      %p268 = por %p266, %p267
      %p270 = scmp.ne.s32.totalorder %s255, %s269
      %p271 = scmp.eq.s32.totalorder %s35, 0
      %p272 = por %p270, %p271
      %s274 = sadd.s32 %s273, 1
      %p277 = scmp.eq.s32.totalorder %s29, 1
      %p278 = scmp.ne.s32.totalorder %s273, %s275
      %p279 = scmp.eq.s32.totalorder %s29, 0
      %p280 = por %p278, %p279
      %p281 = scmp.ne.s32.totalorder %s273, %s275
      %p282 = scmp.eq.s32.totalorder %s34, 1
      %p283 = por %p281, %p282
      %p284 = scmp.ne.s32.totalorder %s275, %s276
      %p285 = scmp.eq.s32.totalorder %s34, 0
      %p286 = por %p284, %p285
      %p287 = scmp.ne.s32.totalorder %s275, %s276
      %p288 = scmp.eq.s32.totalorder %s35, 1
      %p289 = por %p287, %p288
      %p291 = scmp.ne.s32.totalorder %s276, %s290
      %p292 = scmp.eq.s32.totalorder %s35, 0
      %p293 = por %p291, %p292
      %s294 = ssub.s32 %s29, %s36
      %p295 = scmp.eq.s32.totalorder %s294, 0
      %s297 = sadd.s32 %s296, 1
      %s298 = scalar_select %p295, %s296, %s297
      %p301 = pneg %p295
      %p302 = scmp.eq.s32.totalorder %s29, 1
      %p303 = por %p301, %p302
      %p304 = scmp.ne.s32.totalorder %s296, %s299
      %p305 = scmp.eq.s32.totalorder %s29, 0
      %p306 = por %p304, %p305
      %p307 = scmp.ne.s32.totalorder %s296, %s299
      %p308 = scmp.eq.s32.totalorder %s34, 1
      %p309 = por %p307, %p308
      %p310 = scmp.ne.s32.totalorder %s299, %s300
      %p311 = scmp.eq.s32.totalorder %s34, 0
      %p312 = por %p310, %p311
      %p313 = scmp.ne.s32.totalorder %s299, %s300
      %p314 = scmp.eq.s32.totalorder %s35, 1
      %p315 = por %p313, %p314
      %p317 = scmp.ne.s32.totalorder %s300, %s316
      %p318 = scmp.eq.s32.totalorder %s35, 0
      %p319 = por %p317, %p318
      %s320 = ssub.s32 %s29, %s36
      %p321 = scmp.eq.s32.totalorder %s320, 0
      %s323 = sadd.s32 %s322, 1
      %s324 = scalar_select %p321, %s322, %s323
      %p327 = pneg %p321
      %p328 = scmp.eq.s32.totalorder %s29, 1
      %p329 = por %p327, %p328
      %p330 = scmp.ne.s32.totalorder %s322, %s325
      %p331 = scmp.eq.s32.totalorder %s29, 0
      %p332 = por %p330, %p331
      %p333 = scmp.ne.s32.totalorder %s322, %s325
      %p334 = scmp.eq.s32.totalorder %s34, 1
      %p335 = por %p333, %p334
      %p336 = scmp.ne.s32.totalorder %s325, %s326
      %p337 = scmp.eq.s32.totalorder %s34, 0
      %p338 = por %p336, %p337
      %p339 = scmp.ne.s32.totalorder %s325, %s326
      %p340 = scmp.eq.s32.totalorder %s35, 1
      %p341 = por %p339, %p340
      %p343 = scmp.ne.s32.totalorder %s326, %s342
      %p344 = scmp.eq.s32.totalorder %s35, 0
      %p345 = por %p343, %p344
      %p346 = scmp.le.s32.totalorder 1, %s29
      %p347 = scmp.lt.s32.totalorder %s29, 3
      %p348 = pnand %p346, %p347
      %p349 = pneg %p348
      // Predicated region
      $region9: #{tpu_custom_call.1} parent=5 // pred_check
        _
      $region10: #{tpu_custom_call.1} parent=5 // pred_check_branch
        %351 = sbr.rel (%p348) target = $region12
      $region11: #{tpu_custom_call.1} parent=5 // pred_region
        %s352 = ssub.s32 %s29, 1
        // Predicated region
        $region13: #{tpu_custom_call.1} parent=11 // pred_check
          %p353 = pneg %p76
        $region14: #{tpu_custom_call.1} parent=11 // pred_check_branch
          %355 = sbr.rel (%p353) target = $region16
        $region15: #{tpu_custom_call.1} parent=11 // pred_region
          _
        $region16: #{tpu_custom_call.1} parent=11 // pred_fallthru
          _
        // Predicated region
        $region17: #{tpu_custom_call.1} parent=11 // pred_check
          %p356 = pneg %p97
        $region18: #{tpu_custom_call.1} parent=11 // pred_check_branch
          %358 = sbr.rel (%p356) target = $region20
        $region19: #{tpu_custom_call.1} parent=11 // pred_region
          _
        $region20: #{tpu_custom_call.1} parent=11 // pred_fallthru
          _
        // Predicated region
        $region21: #{tpu_custom_call.1} parent=11 // pred_check
          %p359 = pneg %p118
        $region22: #{tpu_custom_call.1} parent=11 // pred_check_branch
          %361 = sbr.rel (%p359) target = $region24
        $region23: #{tpu_custom_call.1} parent=11 // pred_region
          _
        $region24: #{tpu_custom_call.1} parent=11 // pred_fallthru
          _
        // Predicated region
        $region25: #{tpu_custom_call.1} parent=11 // pred_check
          %p362 = pneg %p139
        $region26: #{tpu_custom_call.1} parent=11 // pred_check_branch
          %364 = sbr.rel (%p362) target = $region28
        $region27: #{tpu_custom_call.1} parent=11 // pred_region
          %s366 = ssub.s32 2048, 2048
          %367 = vsyncadd [#allocation3], %s366
          %s368 = sshll.u32 [#allocation2], 4
          %s369 = int_to_ptr.vmem [resolvable:$true] %s368
          %374 = dma.hbm_to_vmem [thread:$0]  %s4, 2048, %s369, [#allocation3], 256, 256, 16
        $region28: #{tpu_custom_call.1} parent=11 // pred_fallthru
          _
        // Predicated region
        $region29: #{tpu_custom_call.1} parent=11 // pred_check
          %p375 = pneg %p160
        $region30: #{tpu_custom_call.1} parent=11 // pred_check_branch
          %377 = sbr.rel (%p375) target = $region32
        $region31: #{tpu_custom_call.1} parent=11 // pred_region
          _
        $region32: #{tpu_custom_call.1} parent=11 // pred_fallthru
          _
        // Predicated region
        $region33: #{tpu_custom_call.1} parent=11 // pred_check
          %p378 = pneg %p181
        $region34: #{tpu_custom_call.1} parent=11 // pred_check_branch
          %380 = sbr.rel (%p378) target = $region36
        $region35: #{tpu_custom_call.1} parent=11 // pred_region
          %s382 = ssub.s32 4096, 4096
          %383 = vsyncadd [#allocation6], %s382
          %s384 = sshll.u32 [#allocation5], 4
          %s385 = int_to_ptr.vmem [resolvable:$true] %s384
          %390 = dma.hbm_to_vmem [thread:$0]  %s6, 4096, %s385, [#allocation6], 128, 128, 8
        $region36: #{tpu_custom_call.1} parent=11 // pred_fallthru
          _
        // Predicated region
        $region37: #{tpu_custom_call.1} parent=11 // pred_check
          %p391 = pneg %p202
        $region38: #{tpu_custom_call.1} parent=11 // pred_check_branch
          %393 = sbr.rel (%p391) target = $region40
        $region39: #{tpu_custom_call.1} parent=11 // pred_region
          %s395 = ssub.s32 16, 16
          %396 = vsyncadd [#allocation6], %s395
          %s398 = sshll.u32 [#allocation7], 4
          %s399 = int_to_ptr.vmem [resolvable:$true] %s398
          %401 = dma.hbm_to_vmem [thread:$0]  %s7, 16, %s399, [#allocation6]
        $region40: #{tpu_custom_call.1} parent=11 // pred_fallthru
          _
        // Predicated region
        $region41: #{tpu_custom_call.1} parent=11 // pred_check
          %p402 = pneg %p223
        $region42: #{tpu_custom_call.1} parent=11 // pred_check_branch
          %404 = sbr.rel (%p402) target = $region44
        $region43: #{tpu_custom_call.1} parent=11 // pred_region
          %s406 = ssub.s32 4096, 4096
          %407 = vsyncadd [#allocation9], %s406
          %s408 = sshll.u32 [#allocation8], 4
          %s409 = int_to_ptr.vmem [resolvable:$true] %s408
          %414 = dma.hbm_to_vmem [thread:$0]  %s8, 4096, %s409, [#allocation9], 256, 256, 16
        $region44: #{tpu_custom_call.1} parent=11 // pred_fallthru
          _
        // Predicated region
        $region45: #{tpu_custom_call.1} parent=11 // pred_check
          %p415 = pneg %p244
        $region46: #{tpu_custom_call.1} parent=11 // pred_check_branch
          %417 = sbr.rel (%p415) target = $region48
        $region47: #{tpu_custom_call.1} parent=11 // pred_region
          _
        $region48: #{tpu_custom_call.1} parent=11 // pred_fallthru
          _
        // Predicated region
        $region49: #{tpu_custom_call.1} parent=11 // pred_check
          %p418 = pneg %p265
        $region50: #{tpu_custom_call.1} parent=11 // pred_check_branch
          %420 = sbr.rel (%p418) target = $region52
        $region51: #{tpu_custom_call.1} parent=11 // pred_region
          _
        $region52: #{tpu_custom_call.1} parent=11 // pred_fallthru
          _
        // Predicated region
        $region53: #{tpu_custom_call.1} parent=11 // pred_check
          %p421 = pneg %p286
        $region54: #{tpu_custom_call.1} parent=11 // pred_check_branch
          %423 = sbr.rel (%p421) target = $region56
        $region55: #{tpu_custom_call.1} parent=11 // pred_region
          %s425 = ssub.s32 32, 32
          %426 = vsyncadd [#allocation9], %s425
          %s428 = sshll.u32 [#allocation10], 4
          %s429 = int_to_ptr.vmem [resolvable:$true] %s428
          %431 = dma.hbm_to_vmem [thread:$0]  %s11, 32, %s429, [#allocation9]
        $region56: #{tpu_custom_call.1} parent=11 // pred_fallthru
          _
      $region12: #{tpu_custom_call.1} parent=5 // pred_fallthru
        _
      %p432 = scmp.lt.s32.totalorder %s29, 2
      // Predicated region
      $region57: #{tpu_custom_call.1} parent=5 // pred_check
        %p433 = pneg %p432
      $region58: #{tpu_custom_call.1} parent=5 // pred_check_branch
        %435 = sbr.rel (%p433) target = $region60
      $region59: #{tpu_custom_call.1} parent=5 // pred_region
        // Predicated region
        $region61: #{tpu_custom_call.1} parent=59 // pred_check
          %p436 = pneg %p49
        $region62: #{tpu_custom_call.1} parent=59 // pred_check_branch
          %438 = sbr.rel (%p436) target = $region64
        $region63: #{tpu_custom_call.1} parent=59 // pred_region
          %s439 = smul.u32 24, %s29
          %p440 = scmp.lt.s32.totalorder %s439, 47
          %s441 = scalar_select %p440, %s439, 47
          %s442 = smul.addr %s441, 8
          %s443 = scalar_lea.vmem %s0, %s442
          %s444 = smul.u32 24, %s29
        $region64: #{tpu_custom_call.1} parent=59 // pred_fallthru
          _
      $region60: #{tpu_custom_call.1} parent=5 // pred_fallthru
        _
      %p445 = scmp.le.s32.totalorder 1, %s29
      %p446 = scmp.lt.s32.totalorder %s29, 3
      %p447 = pnand %p445, %p446
      %p448 = pneg %p447
      // Predicated region
      $region65: #{tpu_custom_call.1} parent=5 // pred_check
        _
      $region66: #{tpu_custom_call.1} parent=5 // pred_check_branch
        %450 = sbr.rel (%p447) target = $region68
      $region67: #{tpu_custom_call.1} parent=5 // pred_region
        %s451 = ssub.s32 %s29, 1
        // Predicated region
        $region69: #{tpu_custom_call.1} parent=67 // pred_check
          %p452 = pneg %p139
        $region70: #{tpu_custom_call.1} parent=67 // pred_check_branch
          %454 = sbr.rel (%p452) target = $region72
        $region71: #{tpu_custom_call.1} parent=67 // pred_region
          %455 = dma.done [#allocation3], 2048
        $region72: #{tpu_custom_call.1} parent=67 // pred_fallthru
          _
        // Predicated region
        $region73: #{tpu_custom_call.1} parent=67 // pred_check
          %p456 = pneg %p181
        $region74: #{tpu_custom_call.1} parent=67 // pred_check_branch
          %458 = sbr.rel (%p456) target = $region76
        $region75: #{tpu_custom_call.1} parent=67 // pred_region
          %459 = dma.done [#allocation6], 4096
        $region76: #{tpu_custom_call.1} parent=67 // pred_fallthru
          _
        // Predicated region
        $region77: #{tpu_custom_call.1} parent=67 // pred_check
          %p460 = pneg %p202
        $region78: #{tpu_custom_call.1} parent=67 // pred_check_branch
          %462 = sbr.rel (%p460) target = $region80
        $region79: #{tpu_custom_call.1} parent=67 // pred_region
          %463 = dma.done [#allocation6], 16
        $region80: #{tpu_custom_call.1} parent=67 // pred_fallthru
          _
        // Predicated region
        $region81: #{tpu_custom_call.1} parent=67 // pred_check
          %p464 = pneg %p223
        $region82: #{tpu_custom_call.1} parent=67 // pred_check_branch
          %466 = sbr.rel (%p464) target = $region84
        $region83: #{tpu_custom_call.1} parent=67 // pred_region
          %467 = dma.done [#allocation9], 4096
        $region84: #{tpu_custom_call.1} parent=67 // pred_fallthru
          _
        // Predicated region
        $region85: #{tpu_custom_call.1} parent=67 // pred_check
          %p468 = pneg %p286
        $region86: #{tpu_custom_call.1} parent=67 // pred_check_branch
          %470 = sbr.rel (%p468) target = $region88
        $region87: #{tpu_custom_call.1} parent=67 // pred_region
          %471 = dma.done [#allocation9], 32
        $region88: #{tpu_custom_call.1} parent=67 // pred_fallthru
          _
        %s472 = smul.u32 24, %s34
        %p473 = scmp.lt.s32.totalorder %s472, 47
        %s474 = scalar_select %p473, %s472, 47
        %s475 = smul.addr %s474, 8
        %s476 = scalar_lea.vmem %s0, %s475
        %p477 = pneg %p55
        %p478 = pneg %p52
        %p479 = pneg %p76
        %p480 = pneg %p73
        %p481 = pneg %p97
        %p482 = pneg %p94
        %p483 = pneg %p118
        %p484 = pneg %p115
        %p485 = pneg %p139
        %p486 = pneg %p136
        %p487 = pneg %p160
        %p488 = pneg %p157
        %p489 = pneg %p181
        %p490 = pneg %p178
        %p491 = pneg %p202
        %p492 = pneg %p199
        %p493 = pneg %p223
        %p494 = pneg %p220
        %p495 = pneg %p244
        %p496 = pneg %p241
        %p497 = pneg %p265
        %p498 = pneg %p262
        %p499 = pneg %p286
        %p500 = pneg %p283
        %p501 = pneg %p312
        %p502 = pneg %p309
        %s503 = sand.u32 %s299, 1
        %s504 = scalar_lea.sflag [#allocation4], %s503
        %s505 = sand.u32 %s299, 1
        %s506 = smul.addr %s505, 16
        %s507 = scalar_lea.vmem [#allocation11], %s506
        %p508 = pneg %p338
        %p509 = pneg %p335
        %s510 = sand.u32 %s325, 1
        %s511 = scalar_lea.sflag [#allocation13], %s510
        %s512 = sand.u32 %s325, 1
        %s513 = smul.addr %s512, 8
        %s514 = scalar_lea.vmem [#allocation12], %s513
        %s515 = smul.u32 24, %s34
        %p516 = scmp.lt.s32.totalorder %s515, 47
        %s517 = scalar_select %p516, %s515, 47
        %s518 = smul.addr %s517, 8
        %s519 = scalar_lea.vmem %s0, %s518
        %s520 = smul.u32 24, %s34
        %v521 = vld [vmem:[%s519] sm:$0xff]
        %v522 = vld [vmem:[%s519 + $0x8] sm:$0xff]
        %v523 = vld [vmem:[%s519 + $0x10] sm:$0xff]
        %v524 = vld [vmem:[%s519 + $0x18] sm:$0xff]
        %v525 = vld [vmem:[%s519 + $0x20] sm:$0xff]
        %v526 = vld [vmem:[%s519 + $0x28] sm:$0xff]
        %v527 = vld [vmem:[%s519 + $0x30] sm:$0xff]
        %v528 = vld [vmem:[%s519 + $0x38] sm:$0xff]
        %v529 = vld [vmem:[%s519 + $0x40] sm:$0xff]
        %v530 = vld [vmem:[%s519 + $0x48] sm:$0xff]
        %v531 = vld [vmem:[%s519 + $0x50] sm:$0xff]
        %v532 = vld [vmem:[%s519 + $0x58] sm:$0xff]
        %v533 = vld [vmem:[%s519 + $0x60] sm:$0xff]
        %v534 = vld [vmem:[%s519 + $0x68] sm:$0xff]
        %v535 = vld [vmem:[%s519 + $0x70] sm:$0xff]
        %v536 = vld [vmem:[%s519 + $0x78] sm:$0xff]
        %v537 = vld [vmem:[%s519 + $0x80] sm:$0xff]
        %v538 = vld [vmem:[%s519 + $0x88] sm:$0xff]
        %v539 = vld [vmem:[%s519 + $0x90] sm:$0xff]
        %v540 = vld [vmem:[%s519 + $0x98] sm:$0xff]
        %v541 = vld [vmem:[%s519 + $0xa0] sm:$0xff]
        %v542 = vld [vmem:[%s519 + $0xa8] sm:$0xff]
        %v543 = vld [vmem:[%s519 + $0xb0] sm:$0xff]
        %v544 = vld [vmem:[%s519 + $0xb8] sm:$0xff]
        %v545 = vlaneseq
        %v546 = vand.u32 %v545, 127
        %547 = vset.pattern.permute.xlu0 0
        %548 = vperm.xlu0 %547, %v521
        %v549 = vpop.permute.xlu0 %548
        %550 = vset.pattern.permute.xlu0 0
        %551 = vperm.xlu0 %550, %v522
        %v552 = vpop.permute.xlu0 %551
        %553 = vset.pattern.permute.xlu0 0
        %554 = vperm.xlu0 %553, %v523
        %v555 = vpop.permute.xlu0 %554
        %556 = vset.pattern.permute.xlu0 0
        %557 = vperm.xlu0 %556, %v524
        %v558 = vpop.permute.xlu0 %557
        %559 = vset.pattern.permute.xlu0 0
        %560 = vperm.xlu0 %559, %v525
        %v561 = vpop.permute.xlu0 %560
        %562 = vset.pattern.permute.xlu0 0
        %563 = vperm.xlu0 %562, %v526
        %v564 = vpop.permute.xlu0 %563
        %565 = vset.pattern.permute.xlu0 0
        %566 = vperm.xlu0 %565, %v527
        %v567 = vpop.permute.xlu0 %566
        %568 = vset.pattern.permute.xlu0 0
        %569 = vperm.xlu0 %568, %v528
        %v570 = vpop.permute.xlu0 %569
        %571 = vset.pattern.permute.xlu0 0
        %572 = vperm.xlu0 %571, %v529
        %v573 = vpop.permute.xlu0 %572
        %574 = vset.pattern.permute.xlu0 0
        %575 = vperm.xlu0 %574, %v530
        %v576 = vpop.permute.xlu0 %575
        %577 = vset.pattern.permute.xlu0 0
        %578 = vperm.xlu0 %577, %v531
        %v579 = vpop.permute.xlu0 %578
        %580 = vset.pattern.permute.xlu0 0
        %581 = vperm.xlu0 %580, %v532
        %v582 = vpop.permute.xlu0 %581
        %583 = vset.pattern.permute.xlu0 0
        %584 = vperm.xlu0 %583, %v533
        %v585 = vpop.permute.xlu0 %584
        %586 = vset.pattern.permute.xlu0 0
        %587 = vperm.xlu0 %586, %v534
        %v588 = vpop.permute.xlu0 %587
        %589 = vset.pattern.permute.xlu0 0
        %590 = vperm.xlu0 %589, %v535
        %v591 = vpop.permute.xlu0 %590
        %592 = vset.pattern.permute.xlu0 0
        %593 = vperm.xlu0 %592, %v536
        %v594 = vpop.permute.xlu0 %593
        %595 = vset.pattern.permute.xlu0 0
        %596 = vperm.xlu0 %595, %v537
        %v597 = vpop.permute.xlu0 %596
        %598 = vset.pattern.permute.xlu0 0
        %599 = vperm.xlu0 %598, %v538
        %v600 = vpop.permute.xlu0 %599
        %601 = vset.pattern.permute.xlu0 0
        %602 = vperm.xlu0 %601, %v539
        %v603 = vpop.permute.xlu0 %602
        %604 = vset.pattern.permute.xlu0 0
        %605 = vperm.xlu0 %604, %v540
        %v606 = vpop.permute.xlu0 %605
        %607 = vset.pattern.permute.xlu0 0
        %608 = vperm.xlu0 %607, %v541
        %v609 = vpop.permute.xlu0 %608
        %610 = vset.pattern.permute.xlu0 0
        %611 = vperm.xlu0 %610, %v542
        %v612 = vpop.permute.xlu0 %611
        %613 = vset.pattern.permute.xlu0 0
        %614 = vperm.xlu0 %613, %v543
        %v615 = vpop.permute.xlu0 %614
        %616 = vset.pattern.permute.xlu0 0
        %617 = vperm.xlu0 %616, %v544
        %v618 = vpop.permute.xlu0 %617
        %vm619 = vcmp.eq.s32.totalorder %v546, %v549
        %vm620 = vcmp.eq.s32.totalorder %v546, %v552
        %vm621 = vcmp.eq.s32.totalorder %v546, %v555
        %vm622 = vcmp.eq.s32.totalorder %v546, %v558
        %vm623 = vcmp.eq.s32.totalorder %v546, %v561
        %vm624 = vcmp.eq.s32.totalorder %v546, %v564
        %vm625 = vcmp.eq.s32.totalorder %v546, %v567
        %vm626 = vcmp.eq.s32.totalorder %v546, %v570
        %vm627 = vcmp.eq.s32.totalorder %v546, %v573
        %vm628 = vcmp.eq.s32.totalorder %v546, %v576
        %vm629 = vcmp.eq.s32.totalorder %v546, %v579
        %vm630 = vcmp.eq.s32.totalorder %v546, %v582
        %vm631 = vcmp.eq.s32.totalorder %v546, %v585
        %vm632 = vcmp.eq.s32.totalorder %v546, %v588
        %vm633 = vcmp.eq.s32.totalorder %v546, %v591
        %vm634 = vcmp.eq.s32.totalorder %v546, %v594
        %vm635 = vcmp.eq.s32.totalorder %v546, %v597
        %vm636 = vcmp.eq.s32.totalorder %v546, %v600
        %vm637 = vcmp.eq.s32.totalorder %v546, %v603
        %vm638 = vcmp.eq.s32.totalorder %v546, %v606
        %vm639 = vcmp.eq.s32.totalorder %v546, %v609
        %vm640 = vcmp.eq.s32.totalorder %v546, %v612
        %vm641 = vcmp.eq.s32.totalorder %v546, %v615
        %vm642 = vcmp.eq.s32.totalorder %v546, %v618
        %v643 = vsel %vm619, 1, 0
        %v644 = vsel %vm620, 1, 0
        %v645 = vsel %vm621, 1, 0
        %v646 = vsel %vm622, 1, 0
        %v647 = vsel %vm623, 1, 0
        %v648 = vsel %vm624, 1, 0
        %v649 = vsel %vm625, 1, 0
        %v650 = vsel %vm626, 1, 0
        %v651 = vsel %vm627, 1, 0
        %v652 = vsel %vm628, 1, 0
        %v653 = vsel %vm629, 1, 0
        %v654 = vsel %vm630, 1, 0
        %v655 = vsel %vm631, 1, 0
        %v656 = vsel %vm632, 1, 0
        %v657 = vsel %vm633, 1, 0
        %v658 = vsel %vm634, 1, 0
        %v659 = vsel %vm635, 1, 0
        %v660 = vsel %vm636, 1, 0
        %v661 = vsel %vm637, 1, 0
        %v662 = vsel %vm638, 1, 0
        %v663 = vsel %vm639, 1, 0
        %v664 = vsel %vm640, 1, 0
        %v665 = vsel %vm641, 1, 0
        %v666 = vsel %vm642, 1, 0
        %v667 = vcvt.s32.f32 %v643
        %v668 = vcvt.s32.f32 %v644
        %v669 = vcvt.s32.f32 %v645
        %v670 = vcvt.s32.f32 %v646
        %v671 = vcvt.s32.f32 %v647
        %v672 = vcvt.s32.f32 %v648
        %v673 = vcvt.s32.f32 %v649
        %v674 = vcvt.s32.f32 %v650
        %v675 = vcvt.s32.f32 %v651
        %v676 = vcvt.s32.f32 %v652
        %v677 = vcvt.s32.f32 %v653
        %v678 = vcvt.s32.f32 %v654
        %v679 = vcvt.s32.f32 %v655
        %v680 = vcvt.s32.f32 %v656
        %v681 = vcvt.s32.f32 %v657
        %v682 = vcvt.s32.f32 %v658
        %v683 = vcvt.s32.f32 %v659
        %v684 = vcvt.s32.f32 %v660
        %v685 = vcvt.s32.f32 %v661
        %v686 = vcvt.s32.f32 %v662
        %v687 = vcvt.s32.f32 %v663
        %v688 = vcvt.s32.f32 %v664
        %v689 = vcvt.s32.f32 %v665
        %v690 = vcvt.s32.f32 %v666
        %v691 = vld [vmem:[%s1] sm:$0xff]
        %v692 = vld [vmem:[%s1 + $0x8] sm:$0xff]
        %v693 = vld [vmem:[%s1 + $0x10] sm:$0xff]
        %v694 = vld [vmem:[%s1 + $0x18] sm:$0xff]
        %v695 = vld [vmem:[%s1 + $0x20] sm:$0xff]
        %vm696 = vcmask 326656
        %v698 = vsel %vm696, %v667, 0
        %v701 = vsel %vm696, %v668, 0
        %v704 = vsel %vm696, %v669, 0
        %v707 = vsel %vm696, %v670, 0
        %v710 = vsel %vm696, %v671, 0
        %v713 = vsel %vm696, %v672, 0
        %v716 = vsel %vm696, %v673, 0
        %v719 = vsel %vm696, %v674, 0
        %v722 = vsel %vm696, %v675, 0
        %v725 = vsel %vm696, %v676, 0
        %v728 = vsel %vm696, %v677, 0
        %v731 = vsel %vm696, %v678, 0
        %v734 = vsel %vm696, %v679, 0
        %v737 = vsel %vm696, %v680, 0
        %v740 = vsel %vm696, %v681, 0
        %v743 = vsel %vm696, %v682, 0
        %v746 = vsel %vm696, %v683, 0
        %v749 = vsel %vm696, %v684, 0
        %v752 = vsel %vm696, %v685, 0
        %v755 = vsel %vm696, %v686, 0
        %v758 = vsel %vm696, %v687, 0
        %v761 = vsel %vm696, %v688, 0
        %v764 = vsel %vm696, %v689, 0
        %v767 = vsel %vm696, %v690, 0
        %769 = vmatprep.subr.mxu0 0.0
        %770 = vmatpush1.msra.mxu0 0.0
        %771 = vmatprep.subr.mxu0 0.0
        %772 = vmatpush1.msra.mxu0 0.0
        %773 = vmatprep.subr.mxu0 0.0
        %774 = vmatpush1.msra.mxu0 0.0
        %775 = vmatprep.subr.mxu0 0.0
        %776 = vmatpush1.msra.mxu0 0.0
        %777 = vmatprep.subr.mxu0 0.0
        %778 = vmatpush1.msra.mxu0 0.0
        %779 = vmatprep.subr.mxu0 0.0
        %780 = vmatpush1.msra.mxu0 0.0
        %781 = vmatprep.subr.mxu0 0.0
        %782 = vmatpush1.msra.mxu0 0.0
        %783 = vmatprep.subr.mxu0 0.0
        %784 = vmatpush1.msra.mxu0 0.0
        %785 = vmatprep.subr.mxu0 0.0
        %786 = vmatpush1.msra.mxu0 0.0
        %787 = vmatprep.subr.mxu0 0.0
        %788 = vmatpush1.msra.mxu0 0.0
        %789 = vmatprep.subr.mxu0 0.0
        %790 = vmatpush1.msra.mxu0 0.0
        %791 = vmatprep.subr.mxu0 0.0
        %792 = vmatpush1.msra.mxu0 %v695
        %793 = vmatprep.subr.mxu0 0.0
        %794 = vmatpush1.msra.mxu0 %v694
        %795 = vmatprep.subr.mxu0 0.0
        %796 = vmatpush1.msra.mxu0 %v693
        %797 = vmatprep.subr.mxu0 0.0
        %798 = vmatpush1.msra.mxu0 %v692
        %799 = vmatprep.subr.mxu0 0.0
        %800 = vmatpush1.msra.mxu0 %v691
        %801 = vmatprep.subr.mxu0 0.0
        %802 = vmatpush2.msra.mxu0 0.0
        %803 = vmatprep.subr.mxu0 0.0
        %804 = vmatpush2.msra.mxu0 0.0
        %805 = vmatprep.subr.mxu0 0.0
        %806 = vmatpush2.msra.mxu0 0.0
        %807 = vmatprep.subr.mxu0 0.0
        %808 = vmatpush2.msra.mxu0 0.0
        %809 = vmatprep.subr.mxu0 0.0
        %810 = vmatpush2.msra.mxu0 0.0
        %811 = vmatprep.subr.mxu0 0.0
        %812 = vmatpush2.msra.mxu0 0.0
        %813 = vmatprep.subr.mxu0 0.0
        %814 = vmatpush2.msra.mxu0 0.0
        %815 = vmatprep.subr.mxu0 0.0
        %816 = vmatpush2.msra.mxu0 0.0
        %817 = vmatprep.subr.mxu0 0.0
        %818 = vmatpush2.msra.mxu0 0.0
        %819 = vmatprep.subr.mxu0 0.0
        %820 = vmatpush2.msra.mxu0 0.0
        %821 = vmatprep.subr.mxu0 0.0
        %822 = vmatpush2.msra.mxu0 0.0
        %823 = vmatprep.subr.mxu0 0.0
        %824 = vmatpush2.msra.mxu0 0.0
        %825 = vmatprep.subr.mxu0 0.0
        %826 = vmatpush2.msra.mxu0 0.0
        %827 = vmatprep.subr.mxu0 0.0
        %828 = vmatpush2.msra.mxu0 0.0
        %829 = vmatprep.subr.mxu0 0.0
        %830 = vmatpush2.msra.mxu0 0.0
        %831 = vmatprep.subr.mxu0 0.0
        %832 = vmatpush2.msra.mxu0 0.0
        %833 = vmatprep.mubr.f32.mxu0 0.0
        %834 = vmatmul.mubr.f32.gmra.mxu0 %v698
        %v835 = vpop.f32.mrf.mxu0
        %v836 = vadd.f32 0.0, %v835
        %v837 = vpop.f32.mrf.mxu0
        %838 = vmatprep.mubr.f32.mxu0 0.0
        %839 = vmatmul.mubr.f32.gmra.mxu0 %v701
        %v840 = vpop.f32.mrf.mxu0
        %v841 = vadd.f32 0.0, %v840
        %v842 = vpop.f32.mrf.mxu0
        %843 = vmatprep.mubr.f32.mxu0 0.0
        %844 = vmatmul.mubr.f32.gmra.mxu0 %v704
        %v845 = vpop.f32.mrf.mxu0
        %v846 = vadd.f32 0.0, %v845
        %v847 = vpop.f32.mrf.mxu0
        %848 = vmatprep.mubr.f32.mxu0 0.0
        %849 = vmatmul.mubr.f32.gmra.mxu0 %v707
        %v850 = vpop.f32.mrf.mxu0
        %v851 = vadd.f32 0.0, %v850
        %v852 = vpop.f32.mrf.mxu0
        %853 = vmatprep.mubr.f32.mxu0 0.0
        %854 = vmatmul.mubr.f32.gmra.mxu0 %v710
        %v855 = vpop.f32.mrf.mxu0
        %v856 = vadd.f32 0.0, %v855
        %v857 = vpop.f32.mrf.mxu0
        %858 = vmatprep.mubr.f32.mxu0 0.0
        %859 = vmatmul.mubr.f32.gmra.mxu0 %v713
        %v860 = vpop.f32.mrf.mxu0
        %v861 = vadd.f32 0.0, %v860
        %v862 = vpop.f32.mrf.mxu0
        %863 = vmatprep.mubr.f32.mxu0 0.0
        %864 = vmatmul.mubr.f32.gmra.mxu0 %v716
        %v865 = vpop.f32.mrf.mxu0
        %v866 = vadd.f32 0.0, %v865
        %v867 = vpop.f32.mrf.mxu0
        %868 = vmatprep.mubr.f32.mxu0 0.0
        %869 = vmatmul.mubr.f32.gmra.mxu0 %v719
        %v870 = vpop.f32.mrf.mxu0
        %v871 = vadd.f32 0.0, %v870
        %v872 = vpop.f32.mrf.mxu0
        %873 = vmatprep.mubr.f32.mxu0 0.0
        %874 = vmatmul.mubr.f32.gmra.mxu0 %v722
        %v875 = vpop.f32.mrf.mxu0
        %v876 = vadd.f32 0.0, %v875
        %v877 = vpop.f32.mrf.mxu0
        %878 = vmatprep.mubr.f32.mxu0 0.0
        %879 = vmatmul.mubr.f32.gmra.mxu0 %v725
        %v880 = vpop.f32.mrf.mxu0
        %v881 = vadd.f32 0.0, %v880
        %v882 = vpop.f32.mrf.mxu0
        %883 = vmatprep.mubr.f32.mxu0 0.0
        %884 = vmatmul.mubr.f32.gmra.mxu0 %v728
        %v885 = vpop.f32.mrf.mxu0
        %v886 = vadd.f32 0.0, %v885
        %v887 = vpop.f32.mrf.mxu0
        %888 = vmatprep.mubr.f32.mxu0 0.0
        %889 = vmatmul.mubr.f32.gmra.mxu0 %v731
        %v890 = vpop.f32.mrf.mxu0
        %v891 = vadd.f32 0.0, %v890
        %v892 = vpop.f32.mrf.mxu0
        %893 = vmatprep.mubr.f32.mxu0 0.0
        %894 = vmatmul.mubr.f32.gmra.mxu0 %v734
        %v895 = vpop.f32.mrf.mxu0
        %v896 = vadd.f32 0.0, %v895
        %v897 = vpop.f32.mrf.mxu0
        %898 = vmatprep.mubr.f32.mxu0 0.0
        %899 = vmatmul.mubr.f32.gmra.mxu0 %v737
        %v900 = vpop.f32.mrf.mxu0
        %v901 = vadd.f32 0.0, %v900
        %v902 = vpop.f32.mrf.mxu0
        %903 = vmatprep.mubr.f32.mxu0 0.0
        %904 = vmatmul.mubr.f32.gmra.mxu0 %v740
        %v905 = vpop.f32.mrf.mxu0
        %v906 = vadd.f32 0.0, %v905
        %v907 = vpop.f32.mrf.mxu0
        %908 = vmatprep.mubr.f32.mxu0 0.0
        %909 = vmatmul.mubr.f32.gmra.mxu0 %v743
        %v910 = vpop.f32.mrf.mxu0
        %v911 = vadd.f32 0.0, %v910
        %v912 = vpop.f32.mrf.mxu0
        %913 = vmatprep.mubr.f32.mxu0 0.0
        %914 = vmatmul.mubr.f32.gmra.mxu0 %v746
        %v915 = vpop.f32.mrf.mxu0
        %v916 = vadd.f32 0.0, %v915
        %v917 = vpop.f32.mrf.mxu0
        %918 = vmatprep.mubr.f32.mxu0 0.0
        %919 = vmatmul.mubr.f32.gmra.mxu0 %v749
        %v920 = vpop.f32.mrf.mxu0
        %v921 = vadd.f32 0.0, %v920
        %v922 = vpop.f32.mrf.mxu0
        %923 = vmatprep.mubr.f32.mxu0 0.0
        %924 = vmatmul.mubr.f32.gmra.mxu0 %v752
        %v925 = vpop.f32.mrf.mxu0
        %v926 = vadd.f32 0.0, %v925
        %v927 = vpop.f32.mrf.mxu0
        %928 = vmatprep.mubr.f32.mxu0 0.0
        %929 = vmatmul.mubr.f32.gmra.mxu0 %v755
        %v930 = vpop.f32.mrf.mxu0
        %v931 = vadd.f32 0.0, %v930
        %v932 = vpop.f32.mrf.mxu0
        %933 = vmatprep.mubr.f32.mxu0 0.0
        %934 = vmatmul.mubr.f32.gmra.mxu0 %v758
        %v935 = vpop.f32.mrf.mxu0
        %v936 = vadd.f32 0.0, %v935
        %v937 = vpop.f32.mrf.mxu0
        %938 = vmatprep.mubr.f32.mxu0 0.0
        %939 = vmatmul.mubr.f32.gmra.mxu0 %v761
        %v940 = vpop.f32.mrf.mxu0
        %v941 = vadd.f32 0.0, %v940
        %v942 = vpop.f32.mrf.mxu0
        %943 = vmatprep.mubr.f32.mxu0 0.0
        %944 = vmatmul.mubr.f32.gmra.mxu0 %v764
        %v945 = vpop.f32.mrf.mxu0
        %v946 = vadd.f32 0.0, %v945
        %v947 = vpop.f32.mrf.mxu0
        %948 = vmatprep.mubr.f32.mxu0 0.0
        %949 = vmatmul.mubr.f32.gmra.mxu0 %v767
        %v950 = vpop.f32.mrf.mxu0
        %v951 = vadd.f32 0.0, %v950
        %v952 = vpop.f32.mrf.mxu0
        %953 = vdwg.mxu0
        %vm978 = vcmask 1046528
        %v979 = vrot.slane %v836, 1
        %v980 = vrot.slane %v841, 1
        %v981 = vsel %vm978, %v979, %v980
        %v982 = vrot.slane %v846, 1
        %v983 = vsel %vm978, %v980, %v982
        %v984 = vrot.slane %v851, 1
        %v985 = vrot.slane %v856, 1
        %v986 = vsel %vm978, %v984, %v985
        %v987 = vrot.slane %v861, 1
        %v988 = vsel %vm978, %v985, %v987
        %v989 = vrot.slane %v866, 1
        %v990 = vrot.slane %v871, 1
        %v991 = vsel %vm978, %v989, %v990
        %v992 = vrot.slane %v876, 1
        %v993 = vsel %vm978, %v990, %v992
        %v994 = vrot.slane %v881, 1
        %v995 = vrot.slane %v886, 1
        %v996 = vsel %vm978, %v994, %v995
        %v997 = vrot.slane %v891, 1
        %v998 = vsel %vm978, %v995, %v997
        %v999 = vrot.slane %v896, 1
        %v1000 = vrot.slane %v901, 1
        %v1001 = vsel %vm978, %v999, %v1000
        %v1002 = vrot.slane %v906, 1
        %v1003 = vsel %vm978, %v1000, %v1002
        %v1004 = vrot.slane %v911, 1
        %v1005 = vrot.slane %v916, 1
        %v1006 = vsel %vm978, %v1004, %v1005
        %v1007 = vrot.slane %v921, 1
        %v1008 = vsel %vm978, %v1005, %v1007
        %v1009 = vrot.slane %v926, 1
        %v1010 = vrot.slane %v931, 1
        %v1011 = vsel %vm978, %v1009, %v1010
        %v1012 = vrot.slane %v936, 1
        %v1013 = vsel %vm978, %v1010, %v1012
        %v1014 = vrot.slane %v941, 1
        %v1015 = vrot.slane %v946, 1
        %v1016 = vsel %vm978, %v1014, %v1015
        %v1017 = vrot.slane %v951, 1
        %v1018 = vsel %vm978, %v1015, %v1017
        %1019 = vrot.lane.b32.xlu0 %v981, 16
        %v1020 = vpop.permute.xlu0 %1019
        %1021 = vrot.lane.b32.xlu0 %v983, 16
        %v1022 = vpop.permute.xlu0 %1021
        %1023 = vrot.lane.b32.xlu0 %v986, 16
        %v1024 = vpop.permute.xlu0 %1023
        %1025 = vrot.lane.b32.xlu0 %v988, 16
        %v1026 = vpop.permute.xlu0 %1025
        %1027 = vrot.lane.b32.xlu0 %v991, 16
        %v1028 = vpop.permute.xlu0 %1027
        %1029 = vrot.lane.b32.xlu0 %v993, 16
        %v1030 = vpop.permute.xlu0 %1029
        %1031 = vrot.lane.b32.xlu0 %v996, 16
        %v1032 = vpop.permute.xlu0 %1031
        %1033 = vrot.lane.b32.xlu0 %v998, 16
        %v1034 = vpop.permute.xlu0 %1033
        %1035 = vrot.lane.b32.xlu0 %v1001, 16
        %v1036 = vpop.permute.xlu0 %1035
        %1037 = vrot.lane.b32.xlu0 %v1003, 16
        %v1038 = vpop.permute.xlu0 %1037
        %1039 = vrot.lane.b32.xlu0 %v1006, 16
        %v1040 = vpop.permute.xlu0 %1039
        %1041 = vrot.lane.b32.xlu0 %v1008, 16
        %v1042 = vpop.permute.xlu0 %1041
        %1043 = vrot.lane.b32.xlu0 %v1011, 16
        %v1044 = vpop.permute.xlu0 %1043
        %1045 = vrot.lane.b32.xlu0 %v1013, 16
        %v1046 = vpop.permute.xlu0 %1045
        %1047 = vrot.lane.b32.xlu0 %v1016, 16
        %v1048 = vpop.permute.xlu0 %1047
        %1049 = vrot.lane.b32.xlu0 %v1018, 16
        %v1050 = vpop.permute.xlu0 %1049
        %vm1067 = vcmask 1045504
        %v1068 = vrot.slane %v836, 2
        %v1069 = vrot.slane %v841, 2
        %v1070 = vsel %vm1067, %v1068, %v1069
        %v1071 = vrot.slane %v846, 2
        %v1072 = vsel %vm1067, %v1069, %v1071
        %v1073 = vrot.slane %v851, 2
        %v1074 = vrot.slane %v856, 2
        %v1075 = vsel %vm1067, %v1073, %v1074
        %v1076 = vrot.slane %v861, 2
        %v1077 = vsel %vm1067, %v1074, %v1076
        %v1078 = vrot.slane %v866, 2
        %v1079 = vrot.slane %v871, 2
        %v1080 = vsel %vm1067, %v1078, %v1079
        %v1081 = vrot.slane %v876, 2
        %v1082 = vsel %vm1067, %v1079, %v1081
        %v1083 = vrot.slane %v881, 2
        %v1084 = vrot.slane %v886, 2
        %v1085 = vsel %vm1067, %v1083, %v1084
        %v1086 = vrot.slane %v891, 2
        %v1087 = vsel %vm1067, %v1084, %v1086
        %v1088 = vrot.slane %v896, 2
        %v1089 = vrot.slane %v901, 2
        %v1090 = vsel %vm1067, %v1088, %v1089
        %v1091 = vrot.slane %v906, 2
        %v1092 = vsel %vm1067, %v1089, %v1091
        %v1093 = vrot.slane %v911, 2
        %v1094 = vrot.slane %v916, 2
        %v1095 = vsel %vm1067, %v1093, %v1094
        %v1096 = vrot.slane %v921, 2
        %v1097 = vsel %vm1067, %v1094, %v1096
        %v1098 = vrot.slane %v926, 2
        %v1099 = vrot.slane %v931, 2
        %v1100 = vsel %vm1067, %v1098, %v1099
        %v1101 = vrot.slane %v936, 2
        %v1102 = vsel %vm1067, %v1099, %v1101
        %v1103 = vrot.slane %v941, 2
        %v1104 = vrot.slane %v946, 2
        %v1105 = vsel %vm1067, %v1103, %v1104
        %v1106 = vrot.slane %v951, 2
        %v1107 = vsel %vm1067, %v1104, %v1106
        %1108 = vrot.lane.b32.xlu0 %v1070, 32
        %v1109 = vpop.permute.xlu0 %1108
        %1110 = vrot.lane.b32.xlu0 %v1072, 32
        %v1111 = vpop.permute.xlu0 %1110
        %1112 = vrot.lane.b32.xlu0 %v1075, 32
        %v1113 = vpop.permute.xlu0 %1112
        %1114 = vrot.lane.b32.xlu0 %v1077, 32
        %v1115 = vpop.permute.xlu0 %1114
        %1116 = vrot.lane.b32.xlu0 %v1080, 32
        %v1117 = vpop.permute.xlu0 %1116
        %1118 = vrot.lane.b32.xlu0 %v1082, 32
        %v1119 = vpop.permute.xlu0 %1118
        %1120 = vrot.lane.b32.xlu0 %v1085, 32
        %v1121 = vpop.permute.xlu0 %1120
        %1122 = vrot.lane.b32.xlu0 %v1087, 32
        %v1123 = vpop.permute.xlu0 %1122
        %1124 = vrot.lane.b32.xlu0 %v1090, 32
        %v1125 = vpop.permute.xlu0 %1124
        %1126 = vrot.lane.b32.xlu0 %v1092, 32
        %v1127 = vpop.permute.xlu0 %1126
        %1128 = vrot.lane.b32.xlu0 %v1095, 32
        %v1129 = vpop.permute.xlu0 %1128
        %1130 = vrot.lane.b32.xlu0 %v1097, 32
        %v1131 = vpop.permute.xlu0 %1130
        %1132 = vrot.lane.b32.xlu0 %v1100, 32
        %v1133 = vpop.permute.xlu0 %1132
        %1134 = vrot.lane.b32.xlu0 %v1102, 32
        %v1135 = vpop.permute.xlu0 %1134
        %1136 = vrot.lane.b32.xlu0 %v1105, 32
        %v1137 = vpop.permute.xlu0 %1136
        %1138 = vrot.lane.b32.xlu0 %v1107, 32
        %v1139 = vpop.permute.xlu0 %1138
        %vm1156 = vcmask 130048
        %v1157 = vsel %vm1156, %v836, %v1020
        %v1158 = vsel %vm1156, %v841, %v1022
        %v1159 = vsel %vm1156, %v851, %v1024
        %v1160 = vsel %vm1156, %v856, %v1026
        %v1161 = vsel %vm1156, %v866, %v1028
        %v1162 = vsel %vm1156, %v871, %v1030
        %v1163 = vsel %vm1156, %v881, %v1032
        %v1164 = vsel %vm1156, %v886, %v1034
        %v1165 = vsel %vm1156, %v896, %v1036
        %v1166 = vsel %vm1156, %v901, %v1038
        %v1167 = vsel %vm1156, %v911, %v1040
        %v1168 = vsel %vm1156, %v916, %v1042
        %v1169 = vsel %vm1156, %v926, %v1044
        %v1170 = vsel %vm1156, %v931, %v1046
        %v1171 = vsel %vm1156, %v941, %v1048
        %v1172 = vsel %vm1156, %v946, %v1050
        %vm1173 = vcmask 261120
        %v1174 = vsel %vm1173, %v1157, %v1109
        %v1175 = vsel %vm1173, %v1158, %v1111
        %v1176 = vsel %vm1173, %v1159, %v1113
        %v1177 = vsel %vm1173, %v1160, %v1115
        %v1178 = vsel %vm1173, %v1161, %v1117
        %v1179 = vsel %vm1173, %v1162, %v1119
        %v1180 = vsel %vm1173, %v1163, %v1121
        %v1181 = vsel %vm1173, %v1164, %v1123
        %v1182 = vsel %vm1173, %v1165, %v1125
        %v1183 = vsel %vm1173, %v1166, %v1127
        %v1184 = vsel %vm1173, %v1167, %v1129
        %v1185 = vsel %vm1173, %v1168, %v1131
        %v1186 = vsel %vm1173, %v1169, %v1133
        %v1187 = vsel %vm1173, %v1170, %v1135
        %v1188 = vsel %vm1173, %v1171, %v1137
        %v1189 = vsel %vm1173, %v1172, %v1139
        %v1190 = vld [vmem:[%s2] sm:$0xff]
        %v1191 = vld [vmem:[%s2 + $0x8] sm:$0xff]
        %v1192 = vld [vmem:[%s2 + $0x10] sm:$0xff]
        %v1193 = vld [vmem:[%s2 + $0x18] sm:$0xff]
        %v1194 = vld [vmem:[%s2 + $0x20] sm:$0xff]
        %v1195 = vld [vmem:[%s2 + $0x28] sm:$0xff]
        %v1196 = vld [vmem:[%s3] sm:$0x1]
        %v1198 = vlaneseq
        %v1199 = vshrl.u32 %v1198, 7
        %v1200 = vsub.s32 0, %v1199
        %v1201 = vrot.slane %v1196, %v1200
        %vm1203 = vcmask 392192
        %v1205 = vsel %vm1203, %v1174, 0
        %v1208 = vsel %vm1203, %v1175, 0
        %v1211 = vsel %vm1203, %v1176, 0
        %v1214 = vsel %vm1203, %v1177, 0
        %v1217 = vsel %vm1203, %v1178, 0
        %v1220 = vsel %vm1203, %v1179, 0
        %v1223 = vsel %vm1203, %v1180, 0
        %v1226 = vsel %vm1203, %v1181, 0
        %v1229 = vsel %vm1203, %v1182, 0
        %v1232 = vsel %vm1203, %v1183, 0
        %v1235 = vsel %vm1203, %v1184, 0
        %v1238 = vsel %vm1203, %v1185, 0
        %v1241 = vsel %vm1203, %v1186, 0
        %v1244 = vsel %vm1203, %v1187, 0
        %v1247 = vsel %vm1203, %v1188, 0
        %v1250 = vsel %vm1203, %v1189, 0
        %1252 = vmatprep.subr.mxu0 0.0
        %1253 = vmatpush1.msra.mxu0 0.0
        %1254 = vmatprep.subr.mxu0 0.0
        %1255 = vmatpush1.msra.mxu0 0.0
        %1256 = vmatprep.subr.mxu0 0.0
        %1257 = vmatpush1.msra.mxu0 0.0
        %1258 = vmatprep.subr.mxu0 0.0
        %1259 = vmatpush1.msra.mxu0 0.0
        %1260 = vmatprep.subr.mxu0 0.0
        %1261 = vmatpush1.msra.mxu0 0.0
        %1262 = vmatprep.subr.mxu0 0.0
        %1263 = vmatpush1.msra.mxu0 0.0
        %1264 = vmatprep.subr.mxu0 0.0
        %1265 = vmatpush1.msra.mxu0 0.0
        %1266 = vmatprep.subr.mxu0 0.0
        %1267 = vmatpush1.msra.mxu0 0.0
        %1268 = vmatprep.subr.mxu0 0.0
        %1269 = vmatpush1.msra.mxu0 0.0
        %1270 = vmatprep.subr.mxu0 0.0
        %1271 = vmatpush1.msra.mxu0 0.0
        %1272 = vmatprep.subr.mxu0 0.0
        %1273 = vmatpush1.msra.mxu0 %v1195
        %1274 = vmatprep.subr.mxu0 0.0
        %1275 = vmatpush1.msra.mxu0 %v1194
        %1276 = vmatprep.subr.mxu0 0.0
        %1277 = vmatpush1.msra.mxu0 %v1193
        %1278 = vmatprep.subr.mxu0 0.0
        %1279 = vmatpush1.msra.mxu0 %v1192
        %1280 = vmatprep.subr.mxu0 0.0
        %1281 = vmatpush1.msra.mxu0 %v1191
        %1282 = vmatprep.subr.mxu0 0.0
        %1283 = vmatpush1.msra.mxu0 %v1190
        %1284 = vmatprep.subr.mxu0 0.0
        %1285 = vmatpush2.msra.mxu0 0.0
        %1286 = vmatprep.subr.mxu0 0.0
        %1287 = vmatpush2.msra.mxu0 0.0
        %1288 = vmatprep.subr.mxu0 0.0
        %1289 = vmatpush2.msra.mxu0 0.0
        %1290 = vmatprep.subr.mxu0 0.0
        %1291 = vmatpush2.msra.mxu0 0.0
        %1292 = vmatprep.subr.mxu0 0.0
        %1293 = vmatpush2.msra.mxu0 0.0
        %1294 = vmatprep.subr.mxu0 0.0
        %1295 = vmatpush2.msra.mxu0 0.0
        %1296 = vmatprep.subr.mxu0 0.0
        %1297 = vmatpush2.msra.mxu0 0.0
        %1298 = vmatprep.subr.mxu0 0.0
        %1299 = vmatpush2.msra.mxu0 0.0
        %1300 = vmatprep.subr.mxu0 0.0
        %1301 = vmatpush2.msra.mxu0 0.0
        %1302 = vmatprep.subr.mxu0 0.0
        %1303 = vmatpush2.msra.mxu0 0.0
        %1304 = vmatprep.subr.mxu0 0.0
        %1305 = vmatpush2.msra.mxu0 0.0
        %1306 = vmatprep.subr.mxu0 0.0
        %1307 = vmatpush2.msra.mxu0 0.0
        %1308 = vmatprep.subr.mxu0 0.0
        %1309 = vmatpush2.msra.mxu0 0.0
        %1310 = vmatprep.subr.mxu0 0.0
        %1311 = vmatpush2.msra.mxu0 0.0
        %1312 = vmatprep.subr.mxu0 0.0
        %1313 = vmatpush2.msra.mxu0 0.0
        %1314 = vmatprep.subr.mxu0 0.0
        %1315 = vmatpush2.msra.mxu0 0.0
        %1316 = vmatprep.mubr.f32.mxu0 0.0
        %1317 = vmatmul.mubr.f32.gmra.mxu0 %v1205
        %v1318 = vpop.f32.mrf.mxu0
        %v1319 = vadd.f32 %v1201, %v1318
        %v1320 = vpop.f32.mrf.mxu0
        %1321 = vmatprep.mubr.f32.mxu0 0.0
        %1322 = vmatmul.mubr.f32.gmra.mxu0 %v1208
        %v1323 = vpop.f32.mrf.mxu0
        %v1324 = vadd.f32 %v1201, %v1323
        %v1325 = vpop.f32.mrf.mxu0
        %1326 = vmatprep.mubr.f32.mxu0 0.0
        %1327 = vmatmul.mubr.f32.gmra.mxu0 %v1211
        %v1328 = vpop.f32.mrf.mxu0
        %v1329 = vadd.f32 %v1201, %v1328
        %v1330 = vpop.f32.mrf.mxu0
        %1331 = vmatprep.mubr.f32.mxu0 0.0
        %1332 = vmatmul.mubr.f32.gmra.mxu0 %v1214
        %v1333 = vpop.f32.mrf.mxu0
        %v1334 = vadd.f32 %v1201, %v1333
        %v1335 = vpop.f32.mrf.mxu0
        %1336 = vmatprep.mubr.f32.mxu0 0.0
        %1337 = vmatmul.mubr.f32.gmra.mxu0 %v1217
        %v1338 = vpop.f32.mrf.mxu0
        %v1339 = vadd.f32 %v1201, %v1338
        %v1340 = vpop.f32.mrf.mxu0
        %1341 = vmatprep.mubr.f32.mxu0 0.0
        %1342 = vmatmul.mubr.f32.gmra.mxu0 %v1220
        %v1343 = vpop.f32.mrf.mxu0
        %v1344 = vadd.f32 %v1201, %v1343
        %v1345 = vpop.f32.mrf.mxu0
        %1346 = vmatprep.mubr.f32.mxu0 0.0
        %1347 = vmatmul.mubr.f32.gmra.mxu0 %v1223
        %v1348 = vpop.f32.mrf.mxu0
        %v1349 = vadd.f32 %v1201, %v1348
        %v1350 = vpop.f32.mrf.mxu0
        %1351 = vmatprep.mubr.f32.mxu0 0.0
        %1352 = vmatmul.mubr.f32.gmra.mxu0 %v1226
        %v1353 = vpop.f32.mrf.mxu0
        %v1354 = vadd.f32 %v1201, %v1353
        %v1355 = vpop.f32.mrf.mxu0
        %1356 = vmatprep.mubr.f32.mxu0 0.0
        %1357 = vmatmul.mubr.f32.gmra.mxu0 %v1229
        %v1358 = vpop.f32.mrf.mxu0
        %v1359 = vadd.f32 %v1201, %v1358
        %v1360 = vpop.f32.mrf.mxu0
        %1361 = vmatprep.mubr.f32.mxu0 0.0
        %1362 = vmatmul.mubr.f32.gmra.mxu0 %v1232
        %v1363 = vpop.f32.mrf.mxu0
        %v1364 = vadd.f32 %v1201, %v1363
        %v1365 = vpop.f32.mrf.mxu0
        %1366 = vmatprep.mubr.f32.mxu0 0.0
        %1367 = vmatmul.mubr.f32.gmra.mxu0 %v1235
        %v1368 = vpop.f32.mrf.mxu0
        %v1369 = vadd.f32 %v1201, %v1368
        %v1370 = vpop.f32.mrf.mxu0
        %1371 = vmatprep.mubr.f32.mxu0 0.0
        %1372 = vmatmul.mubr.f32.gmra.mxu0 %v1238
        %v1373 = vpop.f32.mrf.mxu0
        %v1374 = vadd.f32 %v1201, %v1373
        %v1375 = vpop.f32.mrf.mxu0
        %1376 = vmatprep.mubr.f32.mxu0 0.0
        %1377 = vmatmul.mubr.f32.gmra.mxu0 %v1241
        %v1378 = vpop.f32.mrf.mxu0
        %v1379 = vadd.f32 %v1201, %v1378
        %v1380 = vpop.f32.mrf.mxu0
        %1381 = vmatprep.mubr.f32.mxu0 0.0
        %1382 = vmatmul.mubr.f32.gmra.mxu0 %v1244
        %v1383 = vpop.f32.mrf.mxu0
        %v1384 = vadd.f32 %v1201, %v1383
        %v1385 = vpop.f32.mrf.mxu0
        %1386 = vmatprep.mubr.f32.mxu0 0.0
        %1387 = vmatmul.mubr.f32.gmra.mxu0 %v1247
        %v1388 = vpop.f32.mrf.mxu0
        %v1389 = vadd.f32 %v1201, %v1388
        %v1390 = vpop.f32.mrf.mxu0
        %1391 = vmatprep.mubr.f32.mxu0 0.0
        %1392 = vmatmul.mubr.f32.gmra.mxu0 %v1250
        %v1393 = vpop.f32.mrf.mxu0
        %v1394 = vadd.f32 %v1201, %v1393
        %v1395 = vpop.f32.mrf.mxu0
        %1396 = vdwg.mxu0
        %v1397 = vmax.f32 %v1319, 0.0
        %v1398 = vmax.f32 %v1324, 0.0
        %v1399 = vmax.f32 %v1329, 0.0
        %v1400 = vmax.f32 %v1334, 0.0
        %v1401 = vmax.f32 %v1339, 0.0
        %v1402 = vmax.f32 %v1344, 0.0
        %v1403 = vmax.f32 %v1349, 0.0
        %v1404 = vmax.f32 %v1354, 0.0
        %v1405 = vmax.f32 %v1359, 0.0
        %v1406 = vmax.f32 %v1364, 0.0
        %v1407 = vmax.f32 %v1369, 0.0
        %v1408 = vmax.f32 %v1374, 0.0
        %v1409 = vmax.f32 %v1379, 0.0
        %v1410 = vmax.f32 %v1384, 0.0
        %v1411 = vmax.f32 %v1389, 0.0
        %v1412 = vmax.f32 %v1394, 0.0
        %v1413 = vlaneseq
        %v1414 = vshrl.u32 %v1413, 7
        %v1415 = vadd.s32 %v1414, 8
        %vm1416 = vcmp.ge.s32.totalorder %v1414, 1
        %vm1417 = vcmp.ge.s32.totalorder %v1415, 1
        %vm1418 = vcmp.lt.s32.totalorder %v1414, 9
        %vm1419 = vcmp.lt.s32.totalorder %v1415, 9
        %vm1420 = vmand %vm1416, %vm1418
        %vm1421 = vmand %vm1417, %vm1419
        %v1422 = vsel %vm1420, %v1397, 0.0
        %v1423 = vsel %vm1421, %v1398, 0.0
        %v1424 = vsel %vm1420, %v1399, 0.0
        %v1425 = vsel %vm1421, %v1400, 0.0
        %v1426 = vsel %vm1420, %v1401, 0.0
        %v1427 = vsel %vm1421, %v1402, 0.0
        %v1428 = vsel %vm1420, %v1403, 0.0
        %v1429 = vsel %vm1421, %v1404, 0.0
        %v1430 = vsel %vm1420, %v1405, 0.0
        %v1431 = vsel %vm1421, %v1406, 0.0
        %v1432 = vsel %vm1420, %v1407, 0.0
        %v1433 = vsel %vm1421, %v1408, 0.0
        %v1434 = vsel %vm1420, %v1409, 0.0
        %v1435 = vsel %vm1421, %v1410, 0.0
        %v1436 = vsel %vm1420, %v1411, 0.0
        %v1437 = vsel %vm1421, %v1412, 0.0
        %v1454 = vrot.slane %v1422, 1
        %v1455 = vrot.slane %v1423, 1
        %v1456 = vsel %vm978, %v1454, %v1455
        %v1457 = vrot.slane %v1424, 1
        %v1458 = vrot.slane %v1425, 1
        %v1459 = vsel %vm978, %v1457, %v1458
        %v1460 = vrot.slane %v1426, 1
        %v1461 = vrot.slane %v1427, 1
        %v1462 = vsel %vm978, %v1460, %v1461
        %v1463 = vrot.slane %v1428, 1
        %v1464 = vrot.slane %v1429, 1
        %v1465 = vsel %vm978, %v1463, %v1464
        %v1466 = vrot.slane %v1430, 1
        %v1467 = vrot.slane %v1431, 1
        %v1468 = vsel %vm978, %v1466, %v1467
        %v1469 = vrot.slane %v1432, 1
        %v1470 = vrot.slane %v1433, 1
        %v1471 = vsel %vm978, %v1469, %v1470
        %v1472 = vrot.slane %v1434, 1
        %v1473 = vrot.slane %v1435, 1
        %v1474 = vsel %vm978, %v1472, %v1473
        %v1475 = vrot.slane %v1436, 1
        %v1476 = vrot.slane %v1437, 1
        %v1477 = vsel %vm978, %v1475, %v1476
        %v1486 = vmax.f32 %v1422, %v1456
        %v1487 = vmax.f32 %v1424, %v1459
        %v1488 = vmax.f32 %v1426, %v1462
        %v1489 = vmax.f32 %v1428, %v1465
        %v1490 = vmax.f32 %v1430, %v1468
        %v1491 = vmax.f32 %v1432, %v1471
        %v1492 = vmax.f32 %v1434, %v1474
        %v1493 = vmax.f32 %v1436, %v1477
        %v1494 = vrot.slane %v1422, 2
        %v1495 = vrot.slane %v1423, 2
        %v1496 = vsel %vm1067, %v1494, %v1495
        %v1497 = vrot.slane %v1424, 2
        %v1498 = vrot.slane %v1425, 2
        %v1499 = vsel %vm1067, %v1497, %v1498
        %v1500 = vrot.slane %v1426, 2
        %v1501 = vrot.slane %v1427, 2
        %v1502 = vsel %vm1067, %v1500, %v1501
        %v1503 = vrot.slane %v1428, 2
        %v1504 = vrot.slane %v1429, 2
        %v1505 = vsel %vm1067, %v1503, %v1504
        %v1506 = vrot.slane %v1430, 2
        %v1507 = vrot.slane %v1431, 2
        %v1508 = vsel %vm1067, %v1506, %v1507
        %v1509 = vrot.slane %v1432, 2
        %v1510 = vrot.slane %v1433, 2
        %v1511 = vsel %vm1067, %v1509, %v1510
        %v1512 = vrot.slane %v1434, 2
        %v1513 = vrot.slane %v1435, 2
        %v1514 = vsel %vm1067, %v1512, %v1513
        %v1515 = vrot.slane %v1436, 2
        %v1516 = vrot.slane %v1437, 2
        %v1517 = vsel %vm1067, %v1515, %v1516
        %v1526 = vmax.f32 %v1486, %v1496
        %v1527 = vmax.f32 %v1487, %v1499
        %v1528 = vmax.f32 %v1488, %v1502
        %v1529 = vmax.f32 %v1489, %v1505
        %v1530 = vmax.f32 %v1490, %v1508
        %v1531 = vmax.f32 %v1491, %v1511
        %v1532 = vmax.f32 %v1492, %v1514
        %v1533 = vmax.f32 %v1493, %v1517
        %v1534 = vcombine.low %v1526, %v1528
        %v1535 = vcombine.high %v1526, %v1528
        %v1537 = vunpack.c.l.s4 1983009808
        %v1538 = vunpack.c.0.s8 %v1537
        %v1539 = vlaneseq
        %v1540 = vshrl.u32 %v1539, 7
        %v1541 = vsub.s32 %v1538, %v1540
        %v1542 = vrot.slane %v1534, %v1541
        %v1544 = vunpack.c.l.s4 1983009808
        %v1545 = vunpack.c.0.s8 %v1544
        %v1546 = vlaneseq
        %v1547 = vshrl.u32 %v1546, 7
        %v1548 = vsub.s32 %v1545, %v1547
        %v1549 = vrot.slane %v1535, %v1548
        %v1550 = vcombine.low %v1527, %v1529
        %v1551 = vcombine.high %v1527, %v1529
        %v1553 = vunpack.c.l.s4 1983009808
        %v1554 = vunpack.c.0.s8 %v1553
        %v1555 = vlaneseq
        %v1556 = vshrl.u32 %v1555, 7
        %v1557 = vsub.s32 %v1554, %v1556
        %v1558 = vrot.slane %v1550, %v1557
        %v1560 = vunpack.c.l.s4 1983009808
        %v1561 = vunpack.c.0.s8 %v1560
        %v1562 = vlaneseq
        %v1563 = vshrl.u32 %v1562, 7
        %v1564 = vsub.s32 %v1561, %v1563
        %v1565 = vrot.slane %v1551, %v1564
        %v1566 = vcombine.low %v1530, %v1532
        %v1567 = vcombine.high %v1530, %v1532
        %v1569 = vunpack.c.l.s4 1983009808
        %v1570 = vunpack.c.0.s8 %v1569
        %v1571 = vlaneseq
        %v1572 = vshrl.u32 %v1571, 7
        %v1573 = vsub.s32 %v1570, %v1572
        %v1574 = vrot.slane %v1566, %v1573
        %v1576 = vunpack.c.l.s4 1983009808
        %v1577 = vunpack.c.0.s8 %v1576
        %v1578 = vlaneseq
        %v1579 = vshrl.u32 %v1578, 7
        %v1580 = vsub.s32 %v1577, %v1579
        %v1581 = vrot.slane %v1567, %v1580
        %v1582 = vcombine.low %v1531, %v1533
        %v1583 = vcombine.high %v1531, %v1533
        %v1585 = vunpack.c.l.s4 1983009808
        %v1586 = vunpack.c.0.s8 %v1585
        %v1587 = vlaneseq
        %v1588 = vshrl.u32 %v1587, 7
        %v1589 = vsub.s32 %v1586, %v1588
        %v1590 = vrot.slane %v1582, %v1589
        %v1592 = vunpack.c.l.s4 1983009808
        %v1593 = vunpack.c.0.s8 %v1592
        %v1594 = vlaneseq
        %v1595 = vshrl.u32 %v1594, 7
        %v1596 = vsub.s32 %v1593, %v1595
        %v1597 = vrot.slane %v1583, %v1596
        %v1598 = vcombine.low %v1542, %v1558
        %v1599 = vcombine.high %v1542, %v1558
        %v1601 = vunpack.c.l.s4 1934713408
        %v1602 = vunpack.c.0.s8 %v1601
        %v1603 = vlaneseq
        %v1604 = vshrl.u32 %v1603, 7
        %v1605 = vsub.s32 %v1602, %v1604
        %v1606 = vrot.slane %v1598, %v1605
        %v1608 = vunpack.c.l.s4 1934713408
        %v1609 = vunpack.c.0.s8 %v1608
        %v1610 = vlaneseq
        %v1611 = vshrl.u32 %v1610, 7
        %v1612 = vsub.s32 %v1609, %v1611
        %v1613 = vrot.slane %v1599, %v1612
        %v1614 = vcombine.low %v1549, %v1565
        %v1615 = vcombine.high %v1549, %v1565
        %v1617 = vunpack.c.l.s4 1934713408
        %v1618 = vunpack.c.0.s8 %v1617
        %v1619 = vlaneseq
        %v1620 = vshrl.u32 %v1619, 7
        %v1621 = vsub.s32 %v1618, %v1620
        %v1622 = vrot.slane %v1614, %v1621
        %v1624 = vunpack.c.l.s4 1934713408
        %v1625 = vunpack.c.0.s8 %v1624
        %v1626 = vlaneseq
        %v1627 = vshrl.u32 %v1626, 7
        %v1628 = vsub.s32 %v1625, %v1627
        %v1629 = vrot.slane %v1615, %v1628
        %v1630 = vcombine.low %v1574, %v1590
        %v1631 = vcombine.high %v1574, %v1590
        %v1633 = vunpack.c.l.s4 1934713408
        %v1634 = vunpack.c.0.s8 %v1633
        %v1635 = vlaneseq
        %v1636 = vshrl.u32 %v1635, 7
        %v1637 = vsub.s32 %v1634, %v1636
        %v1638 = vrot.slane %v1630, %v1637
        %v1640 = vunpack.c.l.s4 1934713408
        %v1641 = vunpack.c.0.s8 %v1640
        %v1642 = vlaneseq
        %v1643 = vshrl.u32 %v1642, 7
        %v1644 = vsub.s32 %v1641, %v1643
        %v1645 = vrot.slane %v1631, %v1644
        %v1646 = vcombine.low %v1581, %v1597
        %v1647 = vcombine.high %v1581, %v1597
        %v1649 = vunpack.c.l.s4 1934713408
        %v1650 = vunpack.c.0.s8 %v1649
        %v1651 = vlaneseq
        %v1652 = vshrl.u32 %v1651, 7
        %v1653 = vsub.s32 %v1650, %v1652
        %v1654 = vrot.slane %v1646, %v1653
        %v1656 = vunpack.c.l.s4 1934713408
        %v1657 = vunpack.c.0.s8 %v1656
        %v1658 = vlaneseq
        %v1659 = vshrl.u32 %v1658, 7
        %v1660 = vsub.s32 %v1657, %v1659
        %v1661 = vrot.slane %v1647, %v1660
        %v1662 = vcombine.low %v1606, %v1638
        %v1663 = vcombine.high %v1606, %v1638
        %v1664 = vcombine.low %v1613, %v1645
        %v1665 = vcombine.high %v1613, %v1645
        %v1666 = vcombine.low %v1622, %v1654
        %v1667 = vcombine.high %v1622, %v1654
        %v1668 = vcombine.low %v1629, %v1661
        %v1669 = vcombine.high %v1629, %v1661
        %1671 = vrot.lane.b32.xlu0 %v1663, 8
        %v1672 = vpop.permute.xlu0 %1671
        %1675 = vrot.lane.b32.xlu0 %v1664, 16
        %v1676 = vpop.permute.xlu0 %1675
        %1679 = vrot.lane.b32.xlu0 %v1665, 24
        %v1680 = vpop.permute.xlu0 %1679
        %1683 = vrot.lane.b32.xlu0 %v1666, 32
        %v1684 = vpop.permute.xlu0 %1683
        %1687 = vrot.lane.b32.xlu0 %v1667, 40
        %v1688 = vpop.permute.xlu0 %1687
        %1691 = vrot.lane.b32.xlu0 %v1668, 48
        %v1692 = vpop.permute.xlu0 %1691
        %1695 = vrot.lane.b32.xlu0 %v1669, 56
        %v1696 = vpop.permute.xlu0 %1695
        %vm1698 = vcmask 64512
        %v1699 = vsel %vm1698, %v1662, %v1672
        %v1700 = vsel %vm1156, %v1699, %v1676
        %vm1701 = vcmask 195584
        %v1702 = vsel %vm1701, %v1700, %v1680
        %v1703 = vsel %vm1173, %v1702, %v1684
        %v1704 = vsel %vm696, %v1703, %v1688
        %v1705 = vsel %vm1203, %v1704, %v1692
        %vm1706 = vcmask 457728
        %v1707 = vsel %vm1706, %v1705, %v1696
        %v1708 = vld [vmem:[#allocation2] sm:$0xff]
        %v1709 = vld [vmem:[#allocation2 + $0x8] sm:$0xff]
        %v1710 = vld [vmem:[#allocation2 + $0x10] sm:$0xff]
        %v1711 = vld [vmem:[#allocation2 + $0x18] sm:$0xff]
        %v1712 = vld [vmem:[#allocation2 + $0x20] sm:$0xff]
        %v1713 = vld [vmem:[#allocation2 + $0x28] sm:$0xff]
        %v1714 = vld [vmem:[#allocation2 + $0x30] sm:$0xff]
        %v1715 = vld [vmem:[#allocation2 + $0x38] sm:$0xff]
        %v1716 = vld [vmem:[#allocation2 + $0x40] sm:$0xff]
        %v1717 = vld [vmem:[#allocation2 + $0x48] sm:$0xff]
        %v1718 = vld [vmem:[#allocation2 + $0x50] sm:$0xff]
        %v1719 = vld [vmem:[#allocation2 + $0x58] sm:$0xff]
        %v1720 = vld [vmem:[#allocation2 + $0x60] sm:$0xff]
        %v1721 = vld [vmem:[#allocation2 + $0x68] sm:$0xff]
        %v1722 = vld [vmem:[#allocation2 + $0x70] sm:$0xff]
        %v1723 = vld [vmem:[#allocation2 + $0x78] sm:$0xff]
        %v1724 = vld [vmem:[%s5] sm:$0x3]
        %v1726 = vlaneseq
        %v1727 = vshrl.u32 %v1726, 7
        %v1728 = vsub.s32 0, %v1727
        %v1729 = vrot.slane %v1724, %v1728
        %v1730 = vlaneseq
        %v1731 = vshrl.u32 %v1730, 7
        %v1732 = vsub.s32 1, %v1731
        %v1733 = vrot.slane %v1724, %v1732
        %vm1736 = vcmask 523264
        %v1738 = vsel %vm1736, %v1707, 0
        %1740 = vmatprep.subr.mxu0 0.0
        %1741 = vmatpush1.msra.mxu0 0.0
        %1742 = vmatprep.subr.mxu0 0.0
        %1743 = vmatpush1.msra.mxu0 0.0
        %1744 = vmatprep.subr.mxu0 0.0
        %1745 = vmatpush1.msra.mxu0 0.0
        %1746 = vmatprep.subr.mxu0 0.0
        %1747 = vmatpush1.msra.mxu0 0.0
        %1748 = vmatprep.subr.mxu0 0.0
        %1749 = vmatpush1.msra.mxu0 0.0
        %1750 = vmatprep.subr.mxu0 0.0
        %1751 = vmatpush1.msra.mxu0 0.0
        %1752 = vmatprep.subr.mxu0 0.0
        %1753 = vmatpush1.msra.mxu0 0.0
        %1754 = vmatprep.subr.mxu0 0.0
        %1755 = vmatpush1.msra.mxu0 0.0
        %1756 = vmatprep.subr.mxu0 %v1723
        %1757 = vmatpush1.msra.mxu0 %v1722
        %1758 = vmatprep.subr.mxu0 %v1721
        %1759 = vmatpush1.msra.mxu0 %v1720
        %1760 = vmatprep.subr.mxu0 %v1719
        %1761 = vmatpush1.msra.mxu0 %v1718
        %1762 = vmatprep.subr.mxu0 %v1717
        %1763 = vmatpush1.msra.mxu0 %v1716
        %1764 = vmatprep.subr.mxu0 %v1715
        %1765 = vmatpush1.msra.mxu0 %v1714
        %1766 = vmatprep.subr.mxu0 %v1713
        %1767 = vmatpush1.msra.mxu0 %v1712
        %1768 = vmatprep.subr.mxu0 %v1711
        %1769 = vmatpush1.msra.mxu0 %v1710
        %1770 = vmatprep.subr.mxu0 %v1709
        %1771 = vmatpush1.msra.mxu0 %v1708
        %1772 = vmatprep.subr.mxu0 0.0
        %1773 = vmatpush2.msra.mxu0 0.0
        %1774 = vmatprep.subr.mxu0 0.0
        %1775 = vmatpush2.msra.mxu0 0.0
        %1776 = vmatprep.subr.mxu0 0.0
        %1777 = vmatpush2.msra.mxu0 0.0
        %1778 = vmatprep.subr.mxu0 0.0
        %1779 = vmatpush2.msra.mxu0 0.0
        %1780 = vmatprep.subr.mxu0 0.0
        %1781 = vmatpush2.msra.mxu0 0.0
        %1782 = vmatprep.subr.mxu0 0.0
        %1783 = vmatpush2.msra.mxu0 0.0
        %1784 = vmatprep.subr.mxu0 0.0
        %1785 = vmatpush2.msra.mxu0 0.0
        %1786 = vmatprep.subr.mxu0 0.0
        %1787 = vmatpush2.msra.mxu0 0.0
        %1788 = vmatprep.subr.mxu0 0.0
        %1789 = vmatpush2.msra.mxu0 0.0
        %1790 = vmatprep.subr.mxu0 0.0
        %1791 = vmatpush2.msra.mxu0 0.0
        %1792 = vmatprep.subr.mxu0 0.0
        %1793 = vmatpush2.msra.mxu0 0.0
        %1794 = vmatprep.subr.mxu0 0.0
        %1795 = vmatpush2.msra.mxu0 0.0
        %1796 = vmatprep.subr.mxu0 0.0
        %1797 = vmatpush2.msra.mxu0 0.0
        %1798 = vmatprep.subr.mxu0 0.0
        %1799 = vmatpush2.msra.mxu0 0.0
        %1800 = vmatprep.subr.mxu0 0.0
        %1801 = vmatpush2.msra.mxu0 0.0
        %1802 = vmatprep.subr.mxu0 0.0
        %1803 = vmatpush2.msra.mxu0 0.0
        %1804 = vmatprep.mubr.f32.mxu0 0.0
        %1805 = vmatmul.mubr.f32.gmra.mxu0 %v1738
        %v1806 = vpop.f32.mrf.mxu0
        %v1807 = vadd.f32 %v1729, %v1806
        %v1808 = vpop.f32.mrf.mxu0
        %v1809 = vadd.f32 %v1733, %v1808
        %1810 = vdwg.mxu0
        %v1811 = vmax.f32 %v1807, 0.0
        %v1812 = vmax.f32 %v1809, 0.0
        %v1813 = vld [vmem:[#allocation5] sm:$0xff]
        %v1814 = vld [vmem:[#allocation5 + $0x8] sm:$0xff]
        %v1815 = vld [vmem:[#allocation5 + $0x10] sm:$0xff]
        %v1816 = vld [vmem:[#allocation5 + $0x18] sm:$0xff]
        %v1817 = vld [vmem:[#allocation5 + $0x20] sm:$0xff]
        %v1818 = vld [vmem:[#allocation5 + $0x28] sm:$0xff]
        %v1819 = vld [vmem:[#allocation5 + $0x30] sm:$0xff]
        %v1820 = vld [vmem:[#allocation5 + $0x38] sm:$0xff]
        %v1821 = vld [vmem:[#allocation5 + $0x40] sm:$0xff]
        %v1822 = vld [vmem:[#allocation5 + $0x48] sm:$0xff]
        %v1823 = vld [vmem:[#allocation5 + $0x50] sm:$0xff]
        %v1824 = vld [vmem:[#allocation5 + $0x58] sm:$0xff]
        %v1825 = vld [vmem:[#allocation5 + $0x60] sm:$0xff]
        %v1826 = vld [vmem:[#allocation5 + $0x68] sm:$0xff]
        %v1827 = vld [vmem:[#allocation5 + $0x70] sm:$0xff]
        %v1828 = vld [vmem:[#allocation5 + $0x78] sm:$0xff]
        %v1829 = vld [vmem:[#allocation5 + $0x80] sm:$0xff]
        %v1830 = vld [vmem:[#allocation5 + $0x88] sm:$0xff]
        %v1831 = vld [vmem:[#allocation5 + $0x90] sm:$0xff]
        %v1832 = vld [vmem:[#allocation5 + $0x98] sm:$0xff]
        %v1833 = vld [vmem:[#allocation5 + $0xa0] sm:$0xff]
        %v1834 = vld [vmem:[#allocation5 + $0xa8] sm:$0xff]
        %v1835 = vld [vmem:[#allocation5 + $0xb0] sm:$0xff]
        %v1836 = vld [vmem:[#allocation5 + $0xb8] sm:$0xff]
        %v1837 = vld [vmem:[#allocation5 + $0xc0] sm:$0xff]
        %v1838 = vld [vmem:[#allocation5 + $0xc8] sm:$0xff]
        %v1839 = vld [vmem:[#allocation5 + $0xd0] sm:$0xff]
        %v1840 = vld [vmem:[#allocation5 + $0xd8] sm:$0xff]
        %v1841 = vld [vmem:[#allocation5 + $0xe0] sm:$0xff]
        %v1842 = vld [vmem:[#allocation5 + $0xe8] sm:$0xff]
        %v1843 = vld [vmem:[#allocation5 + $0xf0] sm:$0xff]
        %v1844 = vld [vmem:[#allocation5 + $0xf8] sm:$0xff]
        %v1845 = vld [vmem:[#allocation7] sm:$0x1]
        %v1847 = vlaneseq
        %v1848 = vshrl.u32 %v1847, 7
        %v1849 = vsub.s32 0, %v1848
        %v1850 = vrot.slane %v1845, %v1849
        %1852 = vmatprep.subr.mxu0 0.0
        %1853 = vmatpush1.msra.mxu0 %v1828
        %1854 = vmatprep.subr.mxu0 0.0
        %1855 = vmatpush1.msra.mxu0 %v1827
        %1856 = vmatprep.subr.mxu0 0.0
        %1857 = vmatpush1.msra.mxu0 %v1826
        %1858 = vmatprep.subr.mxu0 0.0
        %1859 = vmatpush1.msra.mxu0 %v1825
        %1860 = vmatprep.subr.mxu0 0.0
        %1861 = vmatpush1.msra.mxu0 %v1824
        %1862 = vmatprep.subr.mxu0 0.0
        %1863 = vmatpush1.msra.mxu0 %v1823
        %1864 = vmatprep.subr.mxu0 0.0
        %1865 = vmatpush1.msra.mxu0 %v1822
        %1866 = vmatprep.subr.mxu0 0.0
        %1867 = vmatpush1.msra.mxu0 %v1821
        %1868 = vmatprep.subr.mxu0 0.0
        %1869 = vmatpush1.msra.mxu0 %v1820
        %1870 = vmatprep.subr.mxu0 0.0
        %1871 = vmatpush1.msra.mxu0 %v1819
        %1872 = vmatprep.subr.mxu0 0.0
        %1873 = vmatpush1.msra.mxu0 %v1818
        %1874 = vmatprep.subr.mxu0 0.0
        %1875 = vmatpush1.msra.mxu0 %v1817
        %1876 = vmatprep.subr.mxu0 0.0
        %1877 = vmatpush1.msra.mxu0 %v1816
        %1878 = vmatprep.subr.mxu0 0.0
        %1879 = vmatpush1.msra.mxu0 %v1815
        %1880 = vmatprep.subr.mxu0 0.0
        %1881 = vmatpush1.msra.mxu0 %v1814
        %1882 = vmatprep.subr.mxu0 0.0
        %1883 = vmatpush1.msra.mxu0 %v1813
        %1884 = vmatprep.subr.mxu0 0.0
        %1885 = vmatpush2.msra.mxu0 %v1844
        %1886 = vmatprep.subr.mxu0 0.0
        %1887 = vmatpush2.msra.mxu0 %v1843
        %1888 = vmatprep.subr.mxu0 0.0
        %1889 = vmatpush2.msra.mxu0 %v1842
        %1890 = vmatprep.subr.mxu0 0.0
        %1891 = vmatpush2.msra.mxu0 %v1841
        %1892 = vmatprep.subr.mxu0 0.0
        %1893 = vmatpush2.msra.mxu0 %v1840
        %1894 = vmatprep.subr.mxu0 0.0
        %1895 = vmatpush2.msra.mxu0 %v1839
        %1896 = vmatprep.subr.mxu0 0.0
        %1897 = vmatpush2.msra.mxu0 %v1838
        %1898 = vmatprep.subr.mxu0 0.0
        %1899 = vmatpush2.msra.mxu0 %v1837
        %1900 = vmatprep.subr.mxu0 0.0
        %1901 = vmatpush2.msra.mxu0 %v1836
        %1902 = vmatprep.subr.mxu0 0.0
        %1903 = vmatpush2.msra.mxu0 %v1835
        %1904 = vmatprep.subr.mxu0 0.0
        %1905 = vmatpush2.msra.mxu0 %v1834
        %1906 = vmatprep.subr.mxu0 0.0
        %1907 = vmatpush2.msra.mxu0 %v1833
        %1908 = vmatprep.subr.mxu0 0.0
        %1909 = vmatpush2.msra.mxu0 %v1832
        %1910 = vmatprep.subr.mxu0 0.0
        %1911 = vmatpush2.msra.mxu0 %v1831
        %1912 = vmatprep.subr.mxu0 0.0
        %1913 = vmatpush2.msra.mxu0 %v1830
        %1914 = vmatprep.subr.mxu0 0.0
        %1915 = vmatpush2.msra.mxu0 %v1829
        %1916 = vmatprep.mubr.f32.mxu0 %v1812
        %1917 = vmatmul.mubr.f32.gmra.mxu0 %v1811
        %v1918 = vpop.f32.mrf.mxu0
        %v1919 = vadd.f32 %v1850, %v1918
        %v1920 = vpop.f32.mrf.mxu0
        %1921 = vdwg.mxu0
        %1922 = vst [vmem:[%s514] sm:$0xff] %v1919
        %v1923 = vld [vmem:[#allocation8] sm:$0xff]
        %v1924 = vld [vmem:[#allocation8 + $0x8] sm:$0xff]
        %v1925 = vld [vmem:[#allocation8 + $0x10] sm:$0xff]
        %v1926 = vld [vmem:[#allocation8 + $0x18] sm:$0xff]
        %v1927 = vld [vmem:[#allocation8 + $0x20] sm:$0xff]
        %v1928 = vld [vmem:[#allocation8 + $0x28] sm:$0xff]
        %v1929 = vld [vmem:[#allocation8 + $0x30] sm:$0xff]
        %v1930 = vld [vmem:[#allocation8 + $0x38] sm:$0xff]
        %v1931 = vld [vmem:[#allocation8 + $0x40] sm:$0xff]
        %v1932 = vld [vmem:[#allocation8 + $0x48] sm:$0xff]
        %v1933 = vld [vmem:[#allocation8 + $0x50] sm:$0xff]
        %v1934 = vld [vmem:[#allocation8 + $0x58] sm:$0xff]
        %v1935 = vld [vmem:[#allocation8 + $0x60] sm:$0xff]
        %v1936 = vld [vmem:[#allocation8 + $0x68] sm:$0xff]
        %v1937 = vld [vmem:[#allocation8 + $0x70] sm:$0xff]
        %v1938 = vld [vmem:[#allocation8 + $0x78] sm:$0xff]
        %v1939 = vld [vmem:[#allocation8 + $0x80] sm:$0xff]
        %v1940 = vld [vmem:[#allocation8 + $0x88] sm:$0xff]
        %v1941 = vld [vmem:[#allocation8 + $0x90] sm:$0xff]
        %v1942 = vld [vmem:[#allocation8 + $0x98] sm:$0xff]
        %v1943 = vld [vmem:[#allocation8 + $0xa0] sm:$0xff]
        %v1944 = vld [vmem:[#allocation8 + $0xa8] sm:$0xff]
        %v1945 = vld [vmem:[#allocation8 + $0xb0] sm:$0xff]
        %v1946 = vld [vmem:[#allocation8 + $0xb8] sm:$0xff]
        %v1947 = vld [vmem:[#allocation8 + $0xc0] sm:$0xff]
        %v1948 = vld [vmem:[#allocation8 + $0xc8] sm:$0xff]
        %v1949 = vld [vmem:[#allocation8 + $0xd0] sm:$0xff]
        %v1950 = vld [vmem:[#allocation8 + $0xd8] sm:$0xff]
        %v1951 = vld [vmem:[#allocation8 + $0xe0] sm:$0xff]
        %v1952 = vld [vmem:[#allocation8 + $0xe8] sm:$0xff]
        %v1953 = vld [vmem:[#allocation8 + $0xf0] sm:$0xff]
        %v1954 = vld [vmem:[#allocation8 + $0xf8] sm:$0xff]
        %v1955 = vld [vmem:[%s9] sm:$0x3]
        %v1957 = vlaneseq
        %v1958 = vshrl.u32 %v1957, 7
        %v1959 = vsub.s32 0, %v1958
        %v1960 = vrot.slane %v1955, %v1959
        %v1961 = vlaneseq
        %v1962 = vshrl.u32 %v1961, 7
        %v1963 = vsub.s32 1, %v1962
        %v1964 = vrot.slane %v1955, %v1963
        %1967 = vmatprep.subr.mxu0 %v1954
        %1968 = vmatpush1.msra.mxu0 %v1953
        %1969 = vmatprep.subr.mxu0 %v1952
        %1970 = vmatpush1.msra.mxu0 %v1951
        %1971 = vmatprep.subr.mxu0 %v1950
        %1972 = vmatpush1.msra.mxu0 %v1949
        %1973 = vmatprep.subr.mxu0 %v1948
        %1974 = vmatpush1.msra.mxu0 %v1947
        %1975 = vmatprep.subr.mxu0 %v1946
        %1976 = vmatpush1.msra.mxu0 %v1945
        %1977 = vmatprep.subr.mxu0 %v1944
        %1978 = vmatpush1.msra.mxu0 %v1943
        %1979 = vmatprep.subr.mxu0 %v1942
        %1980 = vmatpush1.msra.mxu0 %v1941
        %1981 = vmatprep.subr.mxu0 %v1940
        %1982 = vmatpush1.msra.mxu0 %v1939
        %1983 = vmatprep.subr.mxu0 %v1938
        %1984 = vmatpush1.msra.mxu0 %v1937
        %1985 = vmatprep.subr.mxu0 %v1936
        %1986 = vmatpush1.msra.mxu0 %v1935
        %1987 = vmatprep.subr.mxu0 %v1934
        %1988 = vmatpush1.msra.mxu0 %v1933
        %1989 = vmatprep.subr.mxu0 %v1932
        %1990 = vmatpush1.msra.mxu0 %v1931
        %1991 = vmatprep.subr.mxu0 %v1930
        %1992 = vmatpush1.msra.mxu0 %v1929
        %1993 = vmatprep.subr.mxu0 %v1928
        %1994 = vmatpush1.msra.mxu0 %v1927
        %1995 = vmatprep.subr.mxu0 %v1926
        %1996 = vmatpush1.msra.mxu0 %v1925
        %1997 = vmatprep.subr.mxu0 %v1924
        %1998 = vmatpush1.msra.mxu0 %v1923
        %1999 = vmatprep.subr.mxu0 0.0
        %2000 = vmatpush2.msra.mxu0 0.0
        %2001 = vmatprep.subr.mxu0 0.0
        %2002 = vmatpush2.msra.mxu0 0.0
        %2003 = vmatprep.subr.mxu0 0.0
        %2004 = vmatpush2.msra.mxu0 0.0
        %2005 = vmatprep.subr.mxu0 0.0
        %2006 = vmatpush2.msra.mxu0 0.0
        %2007 = vmatprep.subr.mxu0 0.0
        %2008 = vmatpush2.msra.mxu0 0.0
        %2009 = vmatprep.subr.mxu0 0.0
        %2010 = vmatpush2.msra.mxu0 0.0
        %2011 = vmatprep.subr.mxu0 0.0
        %2012 = vmatpush2.msra.mxu0 0.0
        %2013 = vmatprep.subr.mxu0 0.0
        %2014 = vmatpush2.msra.mxu0 0.0
        %2015 = vmatprep.subr.mxu0 0.0
        %2016 = vmatpush2.msra.mxu0 0.0
        %2017 = vmatprep.subr.mxu0 0.0
        %2018 = vmatpush2.msra.mxu0 0.0
        %2019 = vmatprep.subr.mxu0 0.0
        %2020 = vmatpush2.msra.mxu0 0.0
        %2021 = vmatprep.subr.mxu0 0.0
        %2022 = vmatpush2.msra.mxu0 0.0
        %2023 = vmatprep.subr.mxu0 0.0
        %2024 = vmatpush2.msra.mxu0 0.0
        %2025 = vmatprep.subr.mxu0 0.0
        %2026 = vmatpush2.msra.mxu0 0.0
        %2027 = vmatprep.subr.mxu0 0.0
        %2028 = vmatpush2.msra.mxu0 0.0
        %2029 = vmatprep.subr.mxu0 0.0
        %2030 = vmatpush2.msra.mxu0 0.0
        %2031 = vmatprep.mubr.f32.mxu0 0.0
        %2032 = vmatmul.mubr.f32.gmra.mxu0 %v1919
        %v2033 = vpop.f32.mrf.mxu0
        %v2034 = vadd.f32 %v1960, %v2033
        %v2035 = vpop.f32.mrf.mxu0
        %v2036 = vadd.f32 %v1964, %v2035
        %2037 = vdwg.mxu0
        %vm2038 = vcmp.gt.f32.partialorder %v2034, 20.0
        %vm2039 = vcmp.gt.f32.partialorder %v2036, 20.0
        %v2040 = vmin.f32 %v2034, 20.0
        %v2041 = vmin.f32 %v2036, 20.0
        %v2042 = vmul.f32 %v2040, 1.442695
        %v2043 = vpow.pop %v2042
        %v2044 = vmul.f32 %v2041, 1.442695
        %v2045 = vpow.pop %v2044
        %v2046 = vadd.f32 %v2043, 1.0
        %v2047 = vlog2.pop %v2046
        %v2048 = vmul.f32 %v2047, 0.6931472
        %v2049 = vmul.f32 -0.5, %v2043
        %v2050 = vadd.f32 %v2049, 1.0
        %v2051 = vmul.f32 %v2050, %v2043
        %v2052 = vand.u32 2147483647, %v2043
        %vm2053 = vcmp.lt.f32.partialorder %v2052, 0.0004427343
        %v2054 = vsel %vm2053, %v2051, %v2048
        %v2055 = vadd.f32 %v2045, 1.0
        %v2056 = vlog2.pop %v2055
        %v2057 = vmul.f32 %v2056, 0.6931472
        %v2058 = vmul.f32 -0.5, %v2045
        %v2059 = vadd.f32 %v2058, 1.0
        %v2060 = vmul.f32 %v2059, %v2045
        %v2061 = vand.u32 2147483647, %v2045
        %vm2062 = vcmp.lt.f32.partialorder %v2061, 0.0004427343
        %v2063 = vsel %vm2062, %v2060, %v2057
        %v2064 = vsel %vm2038, %v2034, %v2054
        %v2065 = vsel %vm2039, %v2036, %v2063
        %v2066 = vld [vmem:[%s10] sm:$0xff]
        %v2067 = vld [vmem:[%s10 + $0x8] sm:$0xff]
        %v2068 = vld [vmem:[%s10 + $0x10] sm:$0xff]
        %v2069 = vld [vmem:[%s10 + $0x18] sm:$0xff]
        %v2070 = vld [vmem:[%s10 + $0x20] sm:$0xff]
        %v2071 = vld [vmem:[%s10 + $0x28] sm:$0xff]
        %v2072 = vld [vmem:[%s10 + $0x30] sm:$0xff]
        %v2073 = vld [vmem:[%s10 + $0x38] sm:$0xff]
        %v2074 = vld [vmem:[%s10 + $0x40] sm:$0xff]
        %v2075 = vld [vmem:[%s10 + $0x48] sm:$0xff]
        %v2076 = vld [vmem:[%s10 + $0x50] sm:$0xff]
        %v2077 = vld [vmem:[%s10 + $0x58] sm:$0xff]
        %v2078 = vld [vmem:[%s10 + $0x60] sm:$0xff]
        %v2079 = vld [vmem:[%s10 + $0x68] sm:$0xff]
        %v2080 = vld [vmem:[%s10 + $0x70] sm:$0xff]
        %v2081 = vld [vmem:[%s10 + $0x78] sm:$0xff]
        %v2082 = vld [vmem:[%s10 + $0x80] sm:$0xff]
        %v2083 = vld [vmem:[%s10 + $0x88] sm:$0xff]
        %v2084 = vld [vmem:[%s10 + $0x90] sm:$0xff]
        %v2085 = vld [vmem:[%s10 + $0x98] sm:$0xff]
        %v2086 = vld [vmem:[%s10 + $0xa0] sm:$0xff]
        %v2087 = vld [vmem:[%s10 + $0xa8] sm:$0xff]
        %v2088 = vld [vmem:[%s10 + $0xb0] sm:$0xff]
        %v2089 = vld [vmem:[%s10 + $0xb8] sm:$0xff]
        %v2090 = vld [vmem:[%s10 + $0xc0] sm:$0xff]
        %v2091 = vld [vmem:[%s10 + $0xc8] sm:$0xff]
        %v2092 = vld [vmem:[%s10 + $0xd0] sm:$0xff]
        %v2093 = vld [vmem:[%s10 + $0xd8] sm:$0xff]
        %v2094 = vld [vmem:[%s10 + $0xe0] sm:$0xff]
        %v2095 = vld [vmem:[%s10 + $0xe8] sm:$0xff]
        %v2096 = vld [vmem:[%s10 + $0xf0] sm:$0xff]
        %v2097 = vld [vmem:[%s10 + $0xf8] sm:$0xff]
        %v2098 = vld [vmem:[%s10 + $0x100] sm:$0xff]
        %v2099 = vld [vmem:[%s10 + $0x108] sm:$0xff]
        %v2100 = vld [vmem:[%s10 + $0x110] sm:$0xff]
        %v2101 = vld [vmem:[%s10 + $0x118] sm:$0xff]
        %v2102 = vld [vmem:[%s10 + $0x120] sm:$0xff]
        %v2103 = vld [vmem:[%s10 + $0x128] sm:$0xff]
        %v2104 = vld [vmem:[%s10 + $0x130] sm:$0xff]
        %v2105 = vld [vmem:[%s10 + $0x138] sm:$0xff]
        %v2106 = vld [vmem:[%s10 + $0x140] sm:$0xff]
        %v2107 = vld [vmem:[%s10 + $0x148] sm:$0xff]
        %v2108 = vld [vmem:[%s10 + $0x150] sm:$0xff]
        %v2109 = vld [vmem:[%s10 + $0x158] sm:$0xff]
        %v2110 = vld [vmem:[%s10 + $0x160] sm:$0xff]
        %v2111 = vld [vmem:[%s10 + $0x168] sm:$0xff]
        %v2112 = vld [vmem:[%s10 + $0x170] sm:$0xff]
        %v2113 = vld [vmem:[%s10 + $0x178] sm:$0xff]
        %v2114 = vld [vmem:[%s10 + $0x180] sm:$0xff]
        %v2115 = vld [vmem:[%s10 + $0x188] sm:$0xff]
        %v2116 = vld [vmem:[%s10 + $0x190] sm:$0xff]
        %v2117 = vld [vmem:[%s10 + $0x198] sm:$0xff]
        %v2118 = vld [vmem:[%s10 + $0x1a0] sm:$0xff]
        %v2119 = vld [vmem:[%s10 + $0x1a8] sm:$0xff]
        %v2120 = vld [vmem:[%s10 + $0x1b0] sm:$0xff]
        %v2121 = vld [vmem:[%s10 + $0x1b8] sm:$0xff]
        %v2122 = vld [vmem:[%s10 + $0x1c0] sm:$0xff]
        %v2123 = vld [vmem:[%s10 + $0x1c8] sm:$0xff]
        %v2124 = vld [vmem:[%s10 + $0x1d0] sm:$0xff]
        %v2125 = vld [vmem:[%s10 + $0x1d8] sm:$0xff]
        %v2126 = vld [vmem:[%s10 + $0x1e0] sm:$0xff]
        %v2127 = vld [vmem:[%s10 + $0x1e8] sm:$0xff]
        %v2128 = vld [vmem:[%s10 + $0x1f0] sm:$0xff]
        %v2129 = vld [vmem:[%s10 + $0x1f8] sm:$0xff]
        %v2130 = vld [vmem:[#allocation10] sm:$0x3]
        %v2132 = vlaneseq
        %v2133 = vshrl.u32 %v2132, 7
        %v2134 = vsub.s32 0, %v2133
        %v2135 = vrot.slane %v2130, %v2134
        %v2136 = vlaneseq
        %v2137 = vshrl.u32 %v2136, 7
        %v2138 = vsub.s32 1, %v2137
        %v2139 = vrot.slane %v2130, %v2138
        %2142 = vmatprep.subr.mxu0 %v2097
        %2143 = vmatpush1.msra.mxu0 %v2096
        %2144 = vmatprep.subr.mxu0 %v2095
        %2145 = vmatpush1.msra.mxu0 %v2094
        %2146 = vmatprep.subr.mxu0 %v2093
        %2147 = vmatpush1.msra.mxu0 %v2092
        %2148 = vmatprep.subr.mxu0 %v2091
        %2149 = vmatpush1.msra.mxu0 %v2090
        %2150 = vmatprep.subr.mxu0 %v2089
        %2151 = vmatpush1.msra.mxu0 %v2088
        %2152 = vmatprep.subr.mxu0 %v2087
        %2153 = vmatpush1.msra.mxu0 %v2086
        %2154 = vmatprep.subr.mxu0 %v2085
        %2155 = vmatpush1.msra.mxu0 %v2084
        %2156 = vmatprep.subr.mxu0 %v2083
        %2157 = vmatpush1.msra.mxu0 %v2082
        %2158 = vmatprep.subr.mxu0 %v2081
        %2159 = vmatpush1.msra.mxu0 %v2080
        %2160 = vmatprep.subr.mxu0 %v2079
        %2161 = vmatpush1.msra.mxu0 %v2078
        %2162 = vmatprep.subr.mxu0 %v2077
        %2163 = vmatpush1.msra.mxu0 %v2076
        %2164 = vmatprep.subr.mxu0 %v2075
        %2165 = vmatpush1.msra.mxu0 %v2074
        %2166 = vmatprep.subr.mxu0 %v2073
        %2167 = vmatpush1.msra.mxu0 %v2072
        %2168 = vmatprep.subr.mxu0 %v2071
        %2169 = vmatpush1.msra.mxu0 %v2070
        %2170 = vmatprep.subr.mxu0 %v2069
        %2171 = vmatpush1.msra.mxu0 %v2068
        %2172 = vmatprep.subr.mxu0 %v2067
        %2173 = vmatpush1.msra.mxu0 %v2066
        %2174 = vmatprep.subr.mxu0 %v2129
        %2175 = vmatpush2.msra.mxu0 %v2128
        %2176 = vmatprep.subr.mxu0 %v2127
        %2177 = vmatpush2.msra.mxu0 %v2126
        %2178 = vmatprep.subr.mxu0 %v2125
        %2179 = vmatpush2.msra.mxu0 %v2124
        %2180 = vmatprep.subr.mxu0 %v2123
        %2181 = vmatpush2.msra.mxu0 %v2122
        %2182 = vmatprep.subr.mxu0 %v2121
        %2183 = vmatpush2.msra.mxu0 %v2120
        %2184 = vmatprep.subr.mxu0 %v2119
        %2185 = vmatpush2.msra.mxu0 %v2118
        %2186 = vmatprep.subr.mxu0 %v2117
        %2187 = vmatpush2.msra.mxu0 %v2116
        %2188 = vmatprep.subr.mxu0 %v2115
        %2189 = vmatpush2.msra.mxu0 %v2114
        %2190 = vmatprep.subr.mxu0 %v2113
        %2191 = vmatpush2.msra.mxu0 %v2112
        %2192 = vmatprep.subr.mxu0 %v2111
        %2193 = vmatpush2.msra.mxu0 %v2110
        %2194 = vmatprep.subr.mxu0 %v2109
        %2195 = vmatpush2.msra.mxu0 %v2108
        %2196 = vmatprep.subr.mxu0 %v2107
        %2197 = vmatpush2.msra.mxu0 %v2106
        %2198 = vmatprep.subr.mxu0 %v2105
        %2199 = vmatpush2.msra.mxu0 %v2104
        %2200 = vmatprep.subr.mxu0 %v2103
        %2201 = vmatpush2.msra.mxu0 %v2102
        %2202 = vmatprep.subr.mxu0 %v2101
        %2203 = vmatpush2.msra.mxu0 %v2100
        %2204 = vmatprep.subr.mxu0 %v2099
        %2205 = vmatpush2.msra.mxu0 %v2098
        %2206 = vmatprep.mubr.f32.mxu0 %v2065
        %2207 = vmatmul.mubr.f32.gmra.mxu0 %v2064
        %v2208 = vpop.f32.mrf.mxu0
        %v2209 = vadd.f32 %v2135, %v2208
        %v2210 = vpop.f32.mrf.mxu0
        %v2211 = vadd.f32 %v2139, %v2210
        %2212 = vdwg.mxu0
        %2213 = vst [vmem:[%s507] sm:$0xff] %v2209
        %2214 = vst [vmem:[%s507 + $0x8] sm:$0xff] %v2211
        %s2215 = sand.u32 %s299, 1
        %s2216 = scalar_lea.sflag [#allocation4], %s2215
        %s2217 = sand.u32 %s299, 1
        %s2218 = smul.addr %s2217, 16
        %s2219 = scalar_lea.vmem [#allocation11], %s2218
        %s2220 = sand.u32 %s325, 1
        %s2221 = scalar_lea.sflag [#allocation13], %s2220
        %s2222 = sand.u32 %s325, 1
        %s2223 = smul.addr %s2222, 8
        %s2224 = scalar_lea.vmem [#allocation12], %s2223
        // Predicated region
        $region89: #{tpu_custom_call.1} parent=67 // pred_check
          %p2225 = pneg %p309
        $region90: #{tpu_custom_call.1} parent=67 // pred_check_branch
          %2227 = sbr.rel (%p2225) target = $region92
        $region91: #{tpu_custom_call.1} parent=67 // pred_region
          %s2229 = ssub.s32 256, 256
          %2230 = vsyncadd %s2216, %s2229
          %s2231 = smul.addr %s34, 2
          %s2232 = smul.addr %s2231, 128
          %s2233 = scalar_lea.hbm %s12, %s2232
          %s2235 = sshll.u32 %s2219, 4
          %s2236 = int_to_ptr.vmem [resolvable:$true] %s2235
          %2238 = dma.vmem_to_hbm [thread:$0]  %s2236, 256, %s2233, %s2216
        $region92: #{tpu_custom_call.1} parent=67 // pred_fallthru
          _
        // Predicated region
        $region93: #{tpu_custom_call.1} parent=67 // pred_check
          %p2239 = pneg %p335
        $region94: #{tpu_custom_call.1} parent=67 // pred_check_branch
          %2241 = sbr.rel (%p2239) target = $region96
        $region95: #{tpu_custom_call.1} parent=67 // pred_region
          %s2243 = ssub.s32 128, 128
          %2244 = vsyncadd %s2221, %s2243
          %s2245 = smul.addr %s34, 128
          %s2246 = scalar_lea.hbm %s13, %s2245
          %s2248 = sshll.u32 %s2224, 4
          %s2249 = int_to_ptr.vmem [resolvable:$true] %s2248
          %2251 = dma.vmem_to_hbm [thread:$0]  %s2249, 128, %s2246, %s2221
        $region96: #{tpu_custom_call.1} parent=67 // pred_fallthru
          _
      $region68: #{tpu_custom_call.1} parent=5 // pred_fallthru
        _
      %p2252 = scmp.le.s32.totalorder 2, %s29
      // Predicated region
      $region97: #{tpu_custom_call.1} parent=5 // pred_check
        %p2253 = pneg %p2252
      $region98: #{tpu_custom_call.1} parent=5 // pred_check_branch
        %2255 = sbr.rel (%p2253) target = $region100
      $region99: #{tpu_custom_call.1} parent=5 // pred_region
        %s2256 = ssub.s32 %s29, 2
        // Predicated region
        $region101: #{tpu_custom_call.1} parent=99 // pred_check
          %p2257 = pneg %p315
        $region102: #{tpu_custom_call.1} parent=99 // pred_check_branch
          %2259 = sbr.rel (%p2257) target = $region104
        $region103: #{tpu_custom_call.1} parent=99 // pred_region
          %s2260 = sand.u32 %s300, 1
          %s2261 = scalar_lea.sflag [#allocation4], %s2260
          %s2262 = sand.u32 %s300, 1
          %s2263 = smul.addr %s2262, 16
          %s2264 = scalar_lea.vmem [#allocation11], %s2263
          %2265 = dma.done %s2261, 256
        $region104: #{tpu_custom_call.1} parent=99 // pred_fallthru
          _
        // Predicated region
        $region105: #{tpu_custom_call.1} parent=99 // pred_check
          %p2266 = pneg %p341
        $region106: #{tpu_custom_call.1} parent=99 // pred_check_branch
          %2268 = sbr.rel (%p2266) target = $region108
        $region107: #{tpu_custom_call.1} parent=99 // pred_region
          %s2269 = sand.u32 %s326, 1
          %s2270 = scalar_lea.sflag [#allocation13], %s2269
          %s2271 = sand.u32 %s326, 1
          %s2272 = smul.addr %s2271, 8
          %s2273 = scalar_lea.vmem [#allocation12], %s2272
          %2274 = dma.done %s2270, 128
        $region108: #{tpu_custom_call.1} parent=99 // pred_fallthru
          _
      $region100: #{tpu_custom_call.1} parent=5 // pred_fallthru
        _
    $region6: #{tpu_custom_call.1} parent=1 // loop_footer
      %s33 = sadd.s32 1, %s29
    $region7: #{tpu_custom_call.1} parent=1 // loop_footer_branch
      %28 = sbr.rel target = $region3
    $region8: #{tpu_custom_call.1} parent=1 // loop_exit
      _
    %2275 = vsyncpa [#allocation3], 1
    %s2276 = scalar_lea.sflag [#allocation3], 1
    %2277 = vsyncpa %s2276, 1
    %2278 = vsyncpa [#allocation6], 1
    %2279 = vsyncpa [#allocation9], 1
    %2280 = vsyncpa [#allocation4], 1
    %s2281 = scalar_lea.sflag [#allocation4], 1
    %2282 = vsyncpa %s2281, 1
    %2283 = vsyncpa [#allocation13], 1
    %s2284 = scalar_lea.sflag [#allocation13], 1
    %2285 = vsyncpa %s2284, 1

</llo_original>
